<compile_context>
chip_gen: v5e
topology: v5e:2x2
jax: 0.10.0
libtpu: 0.0.40
codegen_flags: <defaults>
</compile_context>

<pallas_src>
import jax
import jax.numpy as jnp
import numpy as np
from jax.experimental import pallas as pl
from jax.experimental.pallas import tpu as pltpu

# ---------------- problem constants (fixed by the PyTorch module) ----------------
N = 3                        # batch
CIN = 3                      # conv_transpose1 in channels
HIN = 5                      # input spatial (5x5)
C1 = 4                       # conv_transpose1 out channels
K1 = 2                       # conv_transpose1 kernel
C2 = 4                       # conv_transpose2 out channels
K2 = 3                       # conv_transpose2 kernel
H1 = HIN + K1 - 1            # 6  -> stage-1 spatial
H2 = H1 + K2 - 1             # 8  -> final spatial
T1 = K1 * K1                 # 4 taps (conv_transpose1)
T2 = K2 * K2                 # 9 taps (conv_transpose2)
NPOS0 = N * HIN * HIN        # 75  input positions  (n, p, q)
NPOS1 = N * H1 * H1          # 108 stage-1 positions (n, i, j)
NPOS2 = N * H2 * H2          # 192 output positions  (n, io, jo)
L0 = 128                     # lane-padded input-position width  (one lane tile)
D1 = 128                     # lane-padded stage-1 width         (one lane tile)
D2 = 256                     # lane-padded output width          (two lane tiles)
KPAD = 8                     # sublane-padded contraction for the channel-mix matmuls

BN_EPS = 0.0009999999747378752
GELU_C0 = 0.044715
GELU_C1 = 0.7978845608028654


# ----------------------------------------------------------------------------------
# Fused kernel: conv_t1 + GELU chain + sigmoid + BN + conv_t2 + GELU chain
# ----------------------------------------------------------------------------------
def _fused_kernel(x_ref, w1_ref, w2_ref, g1_ref, g2_ref, gamma_ref, beta_ref, out_ref):
    f32 = jnp.float32

    # ---- conv_transpose1: one scatter/shift matmul + 4 per-tap channel-mix matmuls --
    s1 = jnp.dot(x_ref[...], g1_ref[...], preferred_element_type=f32)        # (8, 512)
    v1 = jnp.zeros((C1, D1), f32)
    for t in range(T1):
        w_t = w1_ref[:, t * D1:t * D1 + KPAD]                                # (4, 8)
        v1 = v1 + jnp.dot(w_t, s1[:, t * D1:(t + 1) * D1],
                          preferred_element_type=f32)

    # ---- tanh-GELU chain + sigmoid + 1 (v2..v11 of the PyTorch graph) ---------------
    v2 = v1 * 0.5
    v5 = v1 + (v1 * v1 * v1) * GELU_C0
    v7 = jnp.tanh(v5 * GELU_C1)
    v9 = v2 * (v7 + 1.0)
    v11 = 1.0 / (1.0 + jnp.exp(-v9)) + 1.0                                   # sigmoid + 1

    # ---- BatchNorm2d (training mode: biased batch stats over the 108 valid lanes) ---
    lane = jax.lax.broadcasted_iota(jnp.int32, (C1, D1), 1)
    mask = (lane < NPOS1).astype(f32)
    inv_cnt = 1.0 / float(NPOS1)
    mean = jnp.sum(v11 * mask, axis=1, keepdims=True) * inv_cnt              # (4, 1)
    diff = v11 - mean
    var = jnp.sum(diff * diff * mask, axis=1, keepdims=True) * inv_cnt
    v12 = diff * jax.lax.rsqrt(var + BN_EPS) * gamma_ref[...] + beta_ref[...]
    # TODO(synk): running_mean / running_var buffer updates (module state mutation)
    # are not materialized; only the training-mode forward output is produced.

    # ---- conv_transpose2: one shift/gather matmul + 9 per-tap channel-mix matmuls ---
    # G2 rows beyond the 108 valid positions are zero, so the garbage pad lanes of v12
    # never contribute; padding is handled by G2's zero rows (no canvas, no mask).
    v12p = jnp.concatenate([v12, jnp.zeros((KPAD - C1, D1), f32)], axis=0)   # (8, 128)
    s2 = jnp.dot(v12p.astype(jnp.bfloat16), g2_ref[...],
                 preferred_element_type=f32)                                 # (8, 2304)
    v13 = jnp.zeros((C2, D2), f32)
    for t in range(T2):
        w_t = w2_ref[:, t * D2:t * D2 + KPAD]                                # (4, 8)
        v13 = v13 + jnp.dot(w_t, s2[:, t * D2:(t + 1) * D2],
                            preferred_element_type=f32)

    # ---- final tanh-GELU chain (v14..v21); lane-dense (4, 256) store -----------------
    v14 = v13 * 0.5
    v17 = v13 + (v13 * v13 * v13) * GELU_C0
    v19 = jnp.tanh(v17 * GELU_C1)
    out_ref[...] = v14 * (v19 + 1.0)


# ----------------------------------------------------------------------------------
# Wrapper: single no-grid pallas_call; only tiny reshape/pad/transpose glue outside
# ----------------------------------------------------------------------------------
def model_forward(x1, w1pack, w2pack, g1, g2, gamma, beta):
    # channel-major input, lane = n*25 + p*5 + q, zero-padded to one (8, 128) tile
    x75 = jnp.transpose(x1, (1, 0, 2, 3)).reshape(CIN, NPOS0)
    xp = jnp.zeros((KPAD, L0), jnp.float32).at[:CIN, :NPOS0].set(x75)
    out = pl.pallas_call(
        _fused_kernel,
        out_shape=jax.ShapeDtypeStruct((C2, D2), jnp.float32),
        in_specs=[pl.BlockSpec(memory_space=pltpu.MemorySpace.VMEM)] * 7,
        out_specs=pl.BlockSpec(memory_space=pltpu.MemorySpace.VMEM),
    )(xp, w1pack, w2pack, g1, g2, gamma, beta)
    y = out[:, :NPOS2].reshape(C2, N, H2, H2)        # lanes are (n, io, jo)
    return jnp.transpose(y, (1, 0, 2, 3))            # -> NCHW (3, 4, 8, 8)


# ----------------------------------------------------------------------------------
# One-time host-side parameter prep: lane-aligned weight packs + 0/1 scatter matrices
# ----------------------------------------------------------------------------------
def prepare_params(w_ct1, w_ct2, gamma, beta):
    w_ct1 = np.asarray(w_ct1, np.float32)            # (CIN, C1, K1, K1)
    w_ct2 = np.asarray(w_ct2, np.float32)            # (C1, C2, K2, K2)

    # conv_transpose1: tap t=(a,b) maps input (n,p,q) -> output (n, p+a, q+b)
    w1pack = np.zeros((C1, T1 * D1), np.float32)     # W1_t at lanes [t*128, t*128+3)
    g1 = np.zeros((L0, T1 * D1), np.float32)         # rows: input position m (75 used)
    for a in range(K1):
        for b in range(K1):
            t = a * K1 + b
            w1pack[:, t * D1:t * D1 + CIN] = w_ct1[:, :, a, b].T            # (C1, CIN)
            for n in range(N):
                for p in range(HIN):
                    for q in range(HIN):
                        m = n * HIN * HIN + p * HIN + q
                        d = n * H1 * H1 + (p + a) * H1 + (q + b)
                        g1[m, t * D1 + d] = 1.0

    # conv_transpose2: tap t=(a,b) maps stage-1 (n,i,j) -> output (n, i+a, j+b)
    w2pack = np.zeros((C2, T2 * D2), np.float32)     # W2_t at lanes [t*256, t*256+4)
    g2 = np.zeros((D1, T2 * D2), np.float32)         # rows: stage-1 position d (108 used)
    for a in range(K2):
        for b in range(K2):
            t = a * K2 + b
            w2pack[:, t * D2:t * D2 + C1] = w_ct2[:, :, a, b].T             # (C2, C1)
            for n in range(N):
                for i in range(H1):
                    for j in range(H1):
                        d = n * H1 * H1 + i * H1 + j
                        e = n * H2 * H2 + (i + a) * H2 + (j + b)
                        g2[d, t * D2 + e] = 1.0

    return (jnp.asarray(w1pack),
            jnp.asarray(w2pack),
            jnp.asarray(g1),                                   # f32, 256 KB
            jnp.asarray(g2, dtype=jnp.bfloat16),               # 0/1 exact in bf16, 576 KB
            jnp.asarray(np.asarray(gamma, np.float32).reshape(C1, 1)),
            jnp.asarray(np.asarray(beta, np.float32).reshape(C1, 1)))


# ----------------------------------------------------------------------------------
# Pure-JAX reference (PyTorch semantics) for the correctness check in main
# ----------------------------------------------------------------------------------
def _reference_forward(x1, w1, w2, gamma, beta):
    def convt(x, w):
        cin, cout, kh, kw = w.shape
        n, c, h, ww = x.shape
        ho, wo = h + kh - 1, ww + kw - 1
        xp = jnp.pad(x, ((0, 0), (0, 0), (kh - 1, kh - 1), (kw - 1, kw - 1)))
        wf = w[:, :, ::-1, ::-1]
        patches = [xp[:, :, a:a + ho, b:b + wo] for a in range(kh) for b in range(kw)]
        p = jnp.stack(patches, 0).transpose(1, 3, 4, 2, 0).reshape(n * ho * wo, c * kh * kw)
        wm = wf.transpose(0, 2, 3, 1).reshape(c * kh * kw, cout)
        y = jnp.dot(p, wm, precision=jax.lax.Precision.HIGHEST)
        return y.reshape(n, ho, wo, cout).transpose(0, 3, 1, 2)

    def gelu_chain(v):
        return (v * 0.5) * (jnp.tanh((v + v * v * v * GELU_C0) * GELU_C1) + 1.0)

    v1 = convt(x1, w1)
    v11 = jax.nn.sigmoid(gelu_chain(v1)) + 1.0
    mean = v11.mean(axis=(0, 2, 3), keepdims=True)
    var = ((v11 - mean) ** 2).mean(axis=(0, 2, 3), keepdims=True)
    v12 = (v11 - mean) * jax.lax.rsqrt(var + BN_EPS) * gamma.reshape(1, C1, 1, 1) \
          + beta.reshape(1, C1, 1, 1)
    return gelu_chain(convt(v12, w2))


if __name__ == "__main__":
    key = jax.random.PRNGKey(0)
    kx, k1, k2 = jax.random.split(key, 3)

    # Input shape matches the reference script: (3, 3, 5, 5), NCHW.
    x1 = jax.random.normal(kx, (N, CIN, HIN, HIN), dtype=jnp.float32)

    # Deterministic synthetic parameters (shapes match the PyTorch module).
    w_ct1 = jax.random.normal(k1, (CIN, C1, K1, K1), dtype=jnp.float32) * 0.5
    w_ct2 = jax.random.normal(k2, (C1, C2, K2, K2), dtype=jnp.float32) * 0.35
    bn_gamma = jnp.ones((C1,), jnp.float32)    # BatchNorm2d default affine init
    bn_beta = jnp.zeros((C1,), jnp.float32)

    params = prepare_params(w_ct1, w_ct2, bn_gamma, bn_beta)
    out = jax.jit(model_forward)(x1, *params)
    jax.block_until_ready(out)
    assert out.shape == (N, C2, H2, H2), out.shape          # (3, 4, 8, 8)

    ref = _reference_forward(x1, w_ct1, w_ct2, bn_gamma, bn_beta)
    # Tolerance covers MXU bf16 passes amplified by the BatchNorm 1/std rescale.
    np.testing.assert_allclose(np.asarray(out), np.asarray(ref), rtol=4e-2, atol=4e-2)
    print("KERNEL_OK")
</pallas_src>

<mosaic_0001>
module attributes {stable_mosaic.version = 11 : i64} {
  func.func @_fused_kernel(%arg0: memref<8x128xf32, #tpu.memory_space<vmem>>, %arg1: memref<4x512xf32, #tpu.memory_space<vmem>>, %arg2: memref<4x2304xf32, #tpu.memory_space<vmem>>, %arg3: memref<128x512xf32, #tpu.memory_space<vmem>>, %arg4: memref<128x2304xbf16, #tpu.memory_space<vmem>>, %arg5: memref<4x1xf32, #tpu.memory_space<vmem>>, %arg6: memref<4x1xf32, #tpu.memory_space<vmem>>, %arg7: memref<4x256xf32, #tpu.memory_space<vmem>>) attributes {dimension_semantics = [], scalar_prefetch = 0 : i64, scratch_operands = 0 : i64, tpu.core_type = #tpu.core_type<tc>} {
    %c0 = arith.constant 0 : index
    %c0_0 = arith.constant 0 : index
    %0 = vector.load %arg0[%c0, %c0_0] : memref<8x128xf32, #tpu.memory_space<vmem>>, vector<8x128xf32>
    %c0_1 = arith.constant 0 : index
    %c0_2 = arith.constant 0 : index
    %1 = vector.load %arg3[%c0_1, %c0_2] : memref<128x512xf32, #tpu.memory_space<vmem>>, vector<128x512xf32>
    %cst = arith.constant dense<0.000000e+00> : vector<8x512xf32>
    %2 = tpu.matmul %0, %1, %cst {dimension_numbers = #tpu.dot_dimension_numbers<[1], [0], [0], [1], [0, 0, 1, 1], [], []>} : vector<8x128xf32>, vector<128x512xf32>, vector<8x512xf32> -> vector<8x512xf32>
    %cst_3 = arith.constant 0.000000e+00 : f32
    %3 = vector.broadcast %cst_3 : f32 to vector<4x128xf32>
    %c0_4 = arith.constant 0 : index
    %c0_5 = arith.constant 0 : index
    %4 = vector.load %arg1[%c0_4, %c0_5] : memref<4x512xf32, #tpu.memory_space<vmem>>, vector<4x8xf32>
    %5 = vector.extract_strided_slice %2 {offsets = [0, 0], sizes = [8, 128], strides = [1, 1]} : vector<8x512xf32> to vector<8x128xf32>
    %cst_6 = arith.constant dense<0.000000e+00> : vector<4x128xf32>
    %6 = tpu.matmul %4, %5, %cst_6 {dimension_numbers = #tpu.dot_dimension_numbers<[1], [0], [0], [1], [0, 0, 1, 1], [], []>} : vector<4x8xf32>, vector<8x128xf32>, vector<4x128xf32> -> vector<4x128xf32>
    %7 = arith.addf %3, %6 : vector<4x128xf32>
    %c0_7 = arith.constant 0 : index
    %c128 = arith.constant 128 : index
    %8 = vector.load %arg1[%c0_7, %c128] : memref<4x512xf32, #tpu.memory_space<vmem>>, vector<4x8xf32>
    %9 = vector.extract_strided_slice %2 {offsets = [0, 128], sizes = [8, 128], strides = [1, 1]} : vector<8x512xf32> to vector<8x128xf32>
    %cst_8 = arith.constant dense<0.000000e+00> : vector<4x128xf32>
    %10 = tpu.matmul %8, %9, %cst_8 {dimension_numbers = #tpu.dot_dimension_numbers<[1], [0], [0], [1], [0, 0, 1, 1], [], []>} : vector<4x8xf32>, vector<8x128xf32>, vector<4x128xf32> -> vector<4x128xf32>
    %11 = arith.addf %7, %10 : vector<4x128xf32>
    %c0_9 = arith.constant 0 : index
    %c256 = arith.constant 256 : index
    %12 = vector.load %arg1[%c0_9, %c256] : memref<4x512xf32, #tpu.memory_space<vmem>>, vector<4x8xf32>
    %13 = vector.extract_strided_slice %2 {offsets = [0, 256], sizes = [8, 128], strides = [1, 1]} : vector<8x512xf32> to vector<8x128xf32>
    %cst_10 = arith.constant dense<0.000000e+00> : vector<4x128xf32>
    %14 = tpu.matmul %12, %13, %cst_10 {dimension_numbers = #tpu.dot_dimension_numbers<[1], [0], [0], [1], [0, 0, 1, 1], [], []>} : vector<4x8xf32>, vector<8x128xf32>, vector<4x128xf32> -> vector<4x128xf32>
    %15 = arith.addf %11, %14 : vector<4x128xf32>
    %c0_11 = arith.constant 0 : index
    %c384 = arith.constant 384 : index
    %16 = vector.load %arg1[%c0_11, %c384] : memref<4x512xf32, #tpu.memory_space<vmem>>, vector<4x8xf32>
    %17 = vector.extract_strided_slice %2 {offsets = [0, 384], sizes = [8, 128], strides = [1, 1]} : vector<8x512xf32> to vector<8x128xf32>
    %cst_12 = arith.constant dense<0.000000e+00> : vector<4x128xf32>
    %18 = tpu.matmul %16, %17, %cst_12 {dimension_numbers = #tpu.dot_dimension_numbers<[1], [0], [0], [1], [0, 0, 1, 1], [], []>} : vector<4x8xf32>, vector<8x128xf32>, vector<4x128xf32> -> vector<4x128xf32>
    %19 = arith.addf %15, %18 : vector<4x128xf32>
    %cst_13 = arith.constant 5.000000e-01 : f32
    %20 = vector.broadcast %cst_13 : f32 to vector<4x128xf32>
    %21 = arith.mulf %19, %20 : vector<4x128xf32>
    %22 = arith.mulf %19, %19 : vector<4x128xf32>
    %23 = arith.mulf %22, %19 : vector<4x128xf32>
    %cst_14 = arith.constant 4.471500e-02 : f32
    %24 = vector.broadcast %cst_14 : f32 to vector<4x128xf32>
    %25 = arith.mulf %23, %24 : vector<4x128xf32>
    %26 = arith.addf %19, %25 : vector<4x128xf32>
    %cst_15 = arith.constant 0.797884583 : f32
    %27 = vector.broadcast %cst_15 : f32 to vector<4x128xf32>
    %28 = arith.mulf %26, %27 : vector<4x128xf32>
    %29 = math.tanh %28 : vector<4x128xf32>
    %cst_16 = arith.constant 1.000000e+00 : f32
    %30 = vector.broadcast %cst_16 : f32 to vector<4x128xf32>
    %31 = arith.addf %29, %30 : vector<4x128xf32>
    %32 = arith.mulf %21, %31 : vector<4x128xf32>
    %cst_17 = arith.constant 0.000000e+00 : f32
    %33 = vector.broadcast %cst_17 : f32 to vector<4x128xf32>
    %34 = arith.subf %33, %32 : vector<4x128xf32>
    %35 = math.exp %34 : vector<4x128xf32>
    %cst_18 = arith.constant 1.000000e+00 : f32
    %36 = vector.broadcast %cst_18 : f32 to vector<4x128xf32>
    %37 = arith.addf %36, %35 : vector<4x128xf32>
    %cst_19 = arith.constant 1.000000e+00 : f32
    %38 = vector.broadcast %cst_19 : f32 to vector<4x128xf32>
    %39 = arith.divf %38, %37 : vector<4x128xf32>
    %cst_20 = arith.constant 1.000000e+00 : f32
    %40 = vector.broadcast %cst_20 : f32 to vector<4x128xf32>
    %41 = arith.addf %39, %40 : vector<4x128xf32>
    %42 = tpu.iota {dimensions = array<i32: 1>} : vector<4x128xi32>
    %c108_i32 = arith.constant 108 : i32
    %43 = vector.broadcast %c108_i32 : i32 to vector<4x128xi32>
    %44 = arith.cmpi slt, %42, %43 : vector<4x128xi32>
    %45 = arith.extui %44 : vector<4x128xi1> to vector<4x128xi32>
    %46 = arith.sitofp %45 : vector<4x128xi32> to vector<4x128xf32>
    %47 = arith.mulf %41, %46 : vector<4x128xf32>
    %cst_21 = arith.constant dense<0.000000e+00> : vector<4xf32>
    %48 = vector.multi_reduction <add>, %47, %cst_21 [1] : vector<4x128xf32> to vector<4xf32>
    %49 = vector.shape_cast %48 : vector<4xf32> to vector<4x1xf32>
    %cst_22 = arith.constant 0.00925925932 : f32
    %50 = vector.broadcast %cst_22 : f32 to vector<4x1xf32>
    %51 = arith.mulf %49, %50 : vector<4x1xf32>
    %52 = vector.broadcast %51 : vector<4x1xf32> to vector<4x128xf32>
    %53 = arith.subf %41, %52 : vector<4x128xf32>
    %54 = arith.mulf %53, %53 : vector<4x128xf32>
    %55 = arith.mulf %54, %46 : vector<4x128xf32>
    %cst_23 = arith.constant dense<0.000000e+00> : vector<4xf32>
    %56 = vector.multi_reduction <add>, %55, %cst_23 [1] : vector<4x128xf32> to vector<4xf32>
    %57 = vector.shape_cast %56 : vector<4xf32> to vector<4x1xf32>
    %cst_24 = arith.constant 0.00925925932 : f32
    %58 = vector.broadcast %cst_24 : f32 to vector<4x1xf32>
    %59 = arith.mulf %57, %58 : vector<4x1xf32>
    %cst_25 = arith.constant 9.99999931E-4 : f32
    %60 = vector.broadcast %cst_25 : f32 to vector<4x1xf32>
    %61 = arith.addf %59, %60 : vector<4x1xf32>
    %62 = math.rsqrt %61 : vector<4x1xf32>
    %63 = vector.broadcast %62 : vector<4x1xf32> to vector<4x128xf32>
    %64 = arith.mulf %53, %63 : vector<4x128xf32>
    %c0_26 = arith.constant 0 : index
    %c0_27 = arith.constant 0 : index
    %65 = vector.load %arg5[%c0_26, %c0_27] : memref<4x1xf32, #tpu.memory_space<vmem>>, vector<4x1xf32>
    %66 = vector.broadcast %65 : vector<4x1xf32> to vector<4x128xf32>
    %67 = arith.mulf %64, %66 : vector<4x128xf32>
    %c0_28 = arith.constant 0 : index
    %c0_29 = arith.constant 0 : index
    %68 = vector.load %arg6[%c0_28, %c0_29] : memref<4x1xf32, #tpu.memory_space<vmem>>, vector<4x1xf32>
    %69 = vector.broadcast %68 : vector<4x1xf32> to vector<4x128xf32>
    %70 = arith.addf %67, %69 : vector<4x128xf32>
    %cst_30 = arith.constant 0.000000e+00 : f32
    %71 = vector.broadcast %cst_30 : f32 to vector<4x128xf32>
    %72 = tpu.concatenate %70, %71 in 0 : vector<4x128xf32>, vector<4x128xf32> -> vector<8x128xf32>
    %73 = arith.truncf %72 : vector<8x128xf32> to vector<8x128xbf16>
    %c0_31 = arith.constant 0 : index
    %c0_32 = arith.constant 0 : index
    %74 = vector.load %arg4[%c0_31, %c0_32] : memref<128x2304xbf16, #tpu.memory_space<vmem>>, vector<128x2304xbf16>
    %cst_33 = arith.constant dense<0.000000e+00> : vector<8x2304xf32>
    %75 = tpu.matmul %73, %74, %cst_33 {dimension_numbers = #tpu.dot_dimension_numbers<[1], [0], [0], [1], [0, 0, 1, 1], [], []>} : vector<8x128xbf16>, vector<128x2304xbf16>, vector<8x2304xf32> -> vector<8x2304xf32>
    %cst_34 = arith.constant 0.000000e+00 : f32
    %76 = vector.broadcast %cst_34 : f32 to vector<4x256xf32>
    %c0_35 = arith.constant 0 : index
    %c0_36 = arith.constant 0 : index
    %77 = vector.load %arg2[%c0_35, %c0_36] : memref<4x2304xf32, #tpu.memory_space<vmem>>, vector<4x8xf32>
    %78 = vector.extract_strided_slice %75 {offsets = [0, 0], sizes = [8, 256], strides = [1, 1]} : vector<8x2304xf32> to vector<8x256xf32>
    %cst_37 = arith.constant dense<0.000000e+00> : vector<4x256xf32>
    %79 = tpu.matmul %77, %78, %cst_37 {dimension_numbers = #tpu.dot_dimension_numbers<[1], [0], [0], [1], [0, 0, 1, 1], [], []>} : vector<4x8xf32>, vector<8x256xf32>, vector<4x256xf32> -> vector<4x256xf32>
    %80 = arith.addf %76, %79 : vector<4x256xf32>
    %c0_38 = arith.constant 0 : index
    %c256_39 = arith.constant 256 : index
    %81 = vector.load %arg2[%c0_38, %c256_39] : memref<4x2304xf32, #tpu.memory_space<vmem>>, vector<4x8xf32>
    %82 = vector.extract_strided_slice %75 {offsets = [0, 256], sizes = [8, 256], strides = [1, 1]} : vector<8x2304xf32> to vector<8x256xf32>
    %cst_40 = arith.constant dense<0.000000e+00> : vector<4x256xf32>
    %83 = tpu.matmul %81, %82, %cst_40 {dimension_numbers = #tpu.dot_dimension_numbers<[1], [0], [0], [1], [0, 0, 1, 1], [], []>} : vector<4x8xf32>, vector<8x256xf32>, vector<4x256xf32> -> vector<4x256xf32>
    %84 = arith.addf %80, %83 : vector<4x256xf32>
    %c0_41 = arith.constant 0 : index
    %c512 = arith.constant 512 : index
    %85 = vector.load %arg2[%c0_41, %c512] : memref<4x2304xf32, #tpu.memory_space<vmem>>, vector<4x8xf32>
    %86 = vector.extract_strided_slice %75 {offsets = [0, 512], sizes = [8, 256], strides = [1, 1]} : vector<8x2304xf32> to vector<8x256xf32>
    %cst_42 = arith.constant dense<0.000000e+00> : vector<4x256xf32>
    %87 = tpu.matmul %85, %86, %cst_42 {dimension_numbers = #tpu.dot_dimension_numbers<[1], [0], [0], [1], [0, 0, 1, 1], [], []>} : vector<4x8xf32>, vector<8x256xf32>, vector<4x256xf32> -> vector<4x256xf32>
    %88 = arith.addf %84, %87 : vector<4x256xf32>
    %c0_43 = arith.constant 0 : index
    %c768 = arith.constant 768 : index
    %89 = vector.load %arg2[%c0_43, %c768] : memref<4x2304xf32, #tpu.memory_space<vmem>>, vector<4x8xf32>
    %90 = vector.extract_strided_slice %75 {offsets = [0, 768], sizes = [8, 256], strides = [1, 1]} : vector<8x2304xf32> to vector<8x256xf32>
    %cst_44 = arith.constant dense<0.000000e+00> : vector<4x256xf32>
    %91 = tpu.matmul %89, %90, %cst_44 {dimension_numbers = #tpu.dot_dimension_numbers<[1], [0], [0], [1], [0, 0, 1, 1], [], []>} : vector<4x8xf32>, vector<8x256xf32>, vector<4x256xf32> -> vector<4x256xf32>
    %92 = arith.addf %88, %91 : vector<4x256xf32>
    %c0_45 = arith.constant 0 : index
    %c1024 = arith.constant 1024 : index
    %93 = vector.load %arg2[%c0_45, %c1024] : memref<4x2304xf32, #tpu.memory_space<vmem>>, vector<4x8xf32>
    %94 = vector.extract_strided_slice %75 {offsets = [0, 1024], sizes = [8, 256], strides = [1, 1]} : vector<8x2304xf32> to vector<8x256xf32>
    %cst_46 = arith.constant dense<0.000000e+00> : vector<4x256xf32>
    %95 = tpu.matmul %93, %94, %cst_46 {dimension_numbers = #tpu.dot_dimension_numbers<[1], [0], [0], [1], [0, 0, 1, 1], [], []>} : vector<4x8xf32>, vector<8x256xf32>, vector<4x256xf32> -> vector<4x256xf32>
    %96 = arith.addf %92, %95 : vector<4x256xf32>
    %c0_47 = arith.constant 0 : index
    %c1280 = arith.constant 1280 : index
    %97 = vector.load %arg2[%c0_47, %c1280] : memref<4x2304xf32, #tpu.memory_space<vmem>>, vector<4x8xf32>
    %98 = vector.extract_strided_slice %75 {offsets = [0, 1280], sizes = [8, 256], strides = [1, 1]} : vector<8x2304xf32> to vector<8x256xf32>
    %cst_48 = arith.constant dense<0.000000e+00> : vector<4x256xf32>
    %99 = tpu.matmul %97, %98, %cst_48 {dimension_numbers = #tpu.dot_dimension_numbers<[1], [0], [0], [1], [0, 0, 1, 1], [], []>} : vector<4x8xf32>, vector<8x256xf32>, vector<4x256xf32> -> vector<4x256xf32>
    %100 = arith.addf %96, %99 : vector<4x256xf32>
    %c0_49 = arith.constant 0 : index
    %c1536 = arith.constant 1536 : index
    %101 = vector.load %arg2[%c0_49, %c1536] : memref<4x2304xf32, #tpu.memory_space<vmem>>, vector<4x8xf32>
    %102 = vector.extract_strided_slice %75 {offsets = [0, 1536], sizes = [8, 256], strides = [1, 1]} : vector<8x2304xf32> to vector<8x256xf32>
    %cst_50 = arith.constant dense<0.000000e+00> : vector<4x256xf32>
    %103 = tpu.matmul %101, %102, %cst_50 {dimension_numbers = #tpu.dot_dimension_numbers<[1], [0], [0], [1], [0, 0, 1, 1], [], []>} : vector<4x8xf32>, vector<8x256xf32>, vector<4x256xf32> -> vector<4x256xf32>
    %104 = arith.addf %100, %103 : vector<4x256xf32>
    %c0_51 = arith.constant 0 : index
    %c1792 = arith.constant 1792 : index
    %105 = vector.load %arg2[%c0_51, %c1792] : memref<4x2304xf32, #tpu.memory_space<vmem>>, vector<4x8xf32>
    %106 = vector.extract_strided_slice %75 {offsets = [0, 1792], sizes = [8, 256], strides = [1, 1]} : vector<8x2304xf32> to vector<8x256xf32>
    %cst_52 = arith.constant dense<0.000000e+00> : vector<4x256xf32>
    %107 = tpu.matmul %105, %106, %cst_52 {dimension_numbers = #tpu.dot_dimension_numbers<[1], [0], [0], [1], [0, 0, 1, 1], [], []>} : vector<4x8xf32>, vector<8x256xf32>, vector<4x256xf32> -> vector<4x256xf32>
    %108 = arith.addf %104, %107 : vector<4x256xf32>
    %c0_53 = arith.constant 0 : index
    %c2048 = arith.constant 2048 : index
    %109 = vector.load %arg2[%c0_53, %c2048] : memref<4x2304xf32, #tpu.memory_space<vmem>>, vector<4x8xf32>
    %110 = vector.extract_strided_slice %75 {offsets = [0, 2048], sizes = [8, 256], strides = [1, 1]} : vector<8x2304xf32> to vector<8x256xf32>
    %cst_54 = arith.constant dense<0.000000e+00> : vector<4x256xf32>
    %111 = tpu.matmul %109, %110, %cst_54 {dimension_numbers = #tpu.dot_dimension_numbers<[1], [0], [0], [1], [0, 0, 1, 1], [], []>} : vector<4x8xf32>, vector<8x256xf32>, vector<4x256xf32> -> vector<4x256xf32>
    %112 = arith.addf %108, %111 : vector<4x256xf32>
    %cst_55 = arith.constant 5.000000e-01 : f32
    %113 = vector.broadcast %cst_55 : f32 to vector<4x256xf32>
    %114 = arith.mulf %112, %113 : vector<4x256xf32>
    %115 = arith.mulf %112, %112 : vector<4x256xf32>
    %116 = arith.mulf %115, %112 : vector<4x256xf32>
    %cst_56 = arith.constant 4.471500e-02 : f32
    %117 = vector.broadcast %cst_56 : f32 to vector<4x256xf32>
    %118 = arith.mulf %116, %117 : vector<4x256xf32>
    %119 = arith.addf %112, %118 : vector<4x256xf32>
    %cst_57 = arith.constant 0.797884583 : f32
    %120 = vector.broadcast %cst_57 : f32 to vector<4x256xf32>
    %121 = arith.mulf %119, %120 : vector<4x256xf32>
    %122 = math.tanh %121 : vector<4x256xf32>
    %cst_58 = arith.constant 1.000000e+00 : f32
    %123 = vector.broadcast %cst_58 : f32 to vector<4x256xf32>
    %124 = arith.addf %122, %123 : vector<4x256xf32>
    %125 = arith.mulf %114, %124 : vector<4x256xf32>
    %c0_59 = arith.constant 0 : index
    %c0_60 = arith.constant 0 : index
    %126 = vector.load %arg7[%c0_59, %c0_60] : memref<4x256xf32, #tpu.memory_space<vmem>>, vector<4x256xf32>
    tpu.vector_store %arg7[%c0_59, %c0_60], %125 {strides = array<i32>} : memref<4x256xf32, #tpu.memory_space<vmem>>, vector<4x256xf32>,
    return
  }
}

</mosaic_0001>

<llo_original>
// kernel: model_forward.1
$region0: #{model_forward.1}
  #allocation0 [shape = 'u32[]', space=smem, size = 0x4, offset = 0x4, fixed_abs, tag = 'smem constant byte address 0x4 - core index']
  #allocation1 [shape = 'u32[72,128]{1,0:T(1,128)}', space=vmem, size = 0x9000, scoped, tag = 'internal scratch']
  %s0 = inlined_call_operand.vmem [shape: f32[8,128], index: 0, kind: input, shape index: {}]
  %s1 = inlined_call_operand.vmem [shape: f32[4,512], index: 1, kind: input, shape index: {}]
  %s2 = inlined_call_operand.vmem [shape: f32[4,2304], index: 2, kind: input, shape index: {}]
  %s3 = inlined_call_operand.hbm [shape: f32[128,512], index: 3, kind: input, shape index: {}]
  %s4 = inlined_call_operand.hbm [shape: bf16[128,2304], index: 4, kind: input, shape index: {}]
  %s5 = inlined_call_operand.vmem [shape: f32[4,1], index: 5, kind: input, shape index: {}]
  %s6 = inlined_call_operand.vmem [shape: f32[4,1], index: 6, kind: input, shape index: {}]
  %s7 = inlined_call_operand.vmem [shape: f32[4,256], index: 7, kind: output, shape index: {}]
  %s8 = sld [smem:[#allocation0]]
  $region46: #{model_forward.1} parent=0
    _
  %s10 = ssub.s32 1, %s8
  %s11 = scalar_select 0, %s10, %s8
  $region1: #{model_forward.1} parent=0
    #allocation2 [shape = 'u8[262144]{0}', space=vmem, size = 0x40000, scoped, tag = 'input window, operand 3, single buffered']
    #allocation3 [shape = 's32[1]{0}', space=sflag, size = 0x4, scoped, tag = 'scoped memory for model_forward.1']
    #allocation4 [shape = 'u8[589824]{0}', space=vmem, size = 0x90000, scoped, tag = 'input window, operand 4, single buffered']
    #allocation5 [shape = 's32[1]{0}', space=sflag, size = 0x4, scoped, tag = 'scoped memory for model_forward.1']
    %12 = vsyncpa [#allocation3], 0
    %13 = vsyncpa [#allocation5], 0
    // Predicated region
    $region2: #{model_forward.1} parent=1 // pred_check
      _
    $region3: #{model_forward.1} parent=1 // pred_check_branch
      %15 = sbr.rel (0) target = $region5
    $region4: #{model_forward.1} parent=1 // pred_region
      _
    $region5: #{model_forward.1} parent=1 // pred_fallthru
      _
    // Predicated region
    $region6: #{model_forward.1} parent=1 // pred_check
      _
    $region7: #{model_forward.1} parent=1 // pred_check_branch
      %17 = sbr.rel (0) target = $region9
    $region8: #{model_forward.1} parent=1 // pred_region
      _
    $region9: #{model_forward.1} parent=1 // pred_fallthru
      _
    // Predicated region
    $region10: #{model_forward.1} parent=1 // pred_check
      _
    $region11: #{model_forward.1} parent=1 // pred_check_branch
      %19 = sbr.rel (0) target = $region13
    $region12: #{model_forward.1} parent=1 // pred_region
      _
    $region13: #{model_forward.1} parent=1 // pred_fallthru
      _
    // Predicated region
    $region14: #{model_forward.1} parent=1 // pred_check
      _
    $region15: #{model_forward.1} parent=1 // pred_check_branch
      %21 = sbr.rel (0) target = $region17
    $region16: #{model_forward.1} parent=1 // pred_region
      %23 = vsyncadd [#allocation3], 0
      %s24 = sshll.u32 %s3, 4
      %s25 = int_to_ptr.hbm [resolvable:$true] %s24
      %s26 = sshll.u32 [#allocation2], 4
      %s27 = int_to_ptr.vmem [resolvable:$true] %s26
      %32 = dma.hbm_to_vmem [thread:$0]  %s25, 8192, %s27, [#allocation3], 512, 512, 32
    $region17: #{model_forward.1} parent=1 // pred_fallthru
      _
    // Predicated region
    $region18: #{model_forward.1} parent=1 // pred_check
      _
    $region19: #{model_forward.1} parent=1 // pred_check_branch
      %34 = sbr.rel (0) target = $region21
    $region20: #{model_forward.1} parent=1 // pred_region
      %36 = vsyncadd [#allocation5], 0
      %s37 = sshll.u32 %s4, 4
      %s38 = int_to_ptr.hbm [resolvable:$true] %s37
      %s39 = sshll.u32 [#allocation4], 4
      %s40 = int_to_ptr.vmem [resolvable:$true] %s39
      %45 = dma.hbm_to_vmem [thread:$0]  %s38, 18432, %s40, [#allocation5], 1152, 1152, 72
    $region21: #{model_forward.1} parent=1 // pred_fallthru
      _
    // Predicated region
    $region22: #{model_forward.1} parent=1 // pred_check
      _
    $region23: #{model_forward.1} parent=1 // pred_check_branch
      %47 = sbr.rel (0) target = $region25
    $region24: #{model_forward.1} parent=1 // pred_region
      _
    $region25: #{model_forward.1} parent=1 // pred_fallthru
      _
    // Predicated region
    $region26: #{model_forward.1} parent=1 // pred_check
      _
    $region27: #{model_forward.1} parent=1 // pred_check_branch
      %49 = sbr.rel (0) target = $region29
    $region28: #{model_forward.1} parent=1 // pred_region
      _
    $region29: #{model_forward.1} parent=1 // pred_fallthru
      _
    // Predicated region
    $region30: #{model_forward.1} parent=1 // pred_check
      _
    $region31: #{model_forward.1} parent=1 // pred_check_branch
      %51 = sbr.rel (0) target = $region33
    $region32: #{model_forward.1} parent=1 // pred_region
      %53 = dma.done [#allocation3], 8192
    $region33: #{model_forward.1} parent=1 // pred_fallthru
      _
    // Predicated region
    $region34: #{model_forward.1} parent=1 // pred_check
      _
    $region35: #{model_forward.1} parent=1 // pred_check_branch
      %55 = sbr.rel (0) target = $region37
    $region36: #{model_forward.1} parent=1 // pred_region
      %57 = dma.done [#allocation5], 18432
    $region37: #{model_forward.1} parent=1 // pred_fallthru
      _
    %v58 = vld [vmem:[%s0] sm:$0xff]
    %v59 = vld [vmem:[#allocation2] sm:$0xff]
    %v60 = vld [vmem:[#allocation2 + $0x8] sm:$0xff]
    %v61 = vld [vmem:[#allocation2 + $0x10] sm:$0xff]
    %v62 = vld [vmem:[#allocation2 + $0x18] sm:$0xff]
    %v63 = vld [vmem:[#allocation2 + $0x20] sm:$0xff]
    %v64 = vld [vmem:[#allocation2 + $0x28] sm:$0xff]
    %v65 = vld [vmem:[#allocation2 + $0x30] sm:$0xff]
    %v66 = vld [vmem:[#allocation2 + $0x38] sm:$0xff]
    %v67 = vld [vmem:[#allocation2 + $0x40] sm:$0xff]
    %v68 = vld [vmem:[#allocation2 + $0x48] sm:$0xff]
    %v69 = vld [vmem:[#allocation2 + $0x50] sm:$0xff]
    %v70 = vld [vmem:[#allocation2 + $0x58] sm:$0xff]
    %v71 = vld [vmem:[#allocation2 + $0x60] sm:$0xff]
    %v72 = vld [vmem:[#allocation2 + $0x68] sm:$0xff]
    %v73 = vld [vmem:[#allocation2 + $0x70] sm:$0xff]
    %v74 = vld [vmem:[#allocation2 + $0x78] sm:$0xff]
    %v75 = vld [vmem:[#allocation2 + $0x80] sm:$0xff]
    %v76 = vld [vmem:[#allocation2 + $0x88] sm:$0xff]
    %v77 = vld [vmem:[#allocation2 + $0x90] sm:$0xff]
    %v78 = vld [vmem:[#allocation2 + $0x98] sm:$0xff]
    %v79 = vld [vmem:[#allocation2 + $0xa0] sm:$0xff]
    %v80 = vld [vmem:[#allocation2 + $0xa8] sm:$0xff]
    %v81 = vld [vmem:[#allocation2 + $0xb0] sm:$0xff]
    %v82 = vld [vmem:[#allocation2 + $0xb8] sm:$0xff]
    %v83 = vld [vmem:[#allocation2 + $0xc0] sm:$0xff]
    %v84 = vld [vmem:[#allocation2 + $0xc8] sm:$0xff]
    %v85 = vld [vmem:[#allocation2 + $0xd0] sm:$0xff]
    %v86 = vld [vmem:[#allocation2 + $0xd8] sm:$0xff]
    %v87 = vld [vmem:[#allocation2 + $0xe0] sm:$0xff]
    %v88 = vld [vmem:[#allocation2 + $0xe8] sm:$0xff]
    %v89 = vld [vmem:[#allocation2 + $0xf0] sm:$0xff]
    %v90 = vld [vmem:[#allocation2 + $0xf8] sm:$0xff]
    %v91 = vld [vmem:[#allocation2 + $0x100] sm:$0xff]
    %v92 = vld [vmem:[#allocation2 + $0x108] sm:$0xff]
    %v93 = vld [vmem:[#allocation2 + $0x110] sm:$0xff]
    %v94 = vld [vmem:[#allocation2 + $0x118] sm:$0xff]
    %v95 = vld [vmem:[#allocation2 + $0x120] sm:$0xff]
    %v96 = vld [vmem:[#allocation2 + $0x128] sm:$0xff]
    %v97 = vld [vmem:[#allocation2 + $0x130] sm:$0xff]
    %v98 = vld [vmem:[#allocation2 + $0x138] sm:$0xff]
    %v99 = vld [vmem:[#allocation2 + $0x140] sm:$0xff]
    %v100 = vld [vmem:[#allocation2 + $0x148] sm:$0xff]
    %v101 = vld [vmem:[#allocation2 + $0x150] sm:$0xff]
    %v102 = vld [vmem:[#allocation2 + $0x158] sm:$0xff]
    %v103 = vld [vmem:[#allocation2 + $0x160] sm:$0xff]
    %v104 = vld [vmem:[#allocation2 + $0x168] sm:$0xff]
    %v105 = vld [vmem:[#allocation2 + $0x170] sm:$0xff]
    %v106 = vld [vmem:[#allocation2 + $0x178] sm:$0xff]
    %v107 = vld [vmem:[#allocation2 + $0x180] sm:$0xff]
    %v108 = vld [vmem:[#allocation2 + $0x188] sm:$0xff]
    %v109 = vld [vmem:[#allocation2 + $0x190] sm:$0xff]
    %v110 = vld [vmem:[#allocation2 + $0x198] sm:$0xff]
    %v111 = vld [vmem:[#allocation2 + $0x1a0] sm:$0xff]
    %v112 = vld [vmem:[#allocation2 + $0x1a8] sm:$0xff]
    %v113 = vld [vmem:[#allocation2 + $0x1b0] sm:$0xff]
    %v114 = vld [vmem:[#allocation2 + $0x1b8] sm:$0xff]
    %v115 = vld [vmem:[#allocation2 + $0x1c0] sm:$0xff]
    %v116 = vld [vmem:[#allocation2 + $0x1c8] sm:$0xff]
    %v117 = vld [vmem:[#allocation2 + $0x1d0] sm:$0xff]
    %v118 = vld [vmem:[#allocation2 + $0x1d8] sm:$0xff]
    %v119 = vld [vmem:[#allocation2 + $0x1e0] sm:$0xff]
    %v120 = vld [vmem:[#allocation2 + $0x1e8] sm:$0xff]
    %v121 = vld [vmem:[#allocation2 + $0x1f0] sm:$0xff]
    %v122 = vld [vmem:[#allocation2 + $0x1f8] sm:$0xff]
    %123 = vmatpush.msra.mxu0 %v119
    %124 = vmatpush.msra.mxu0 %v115
    %125 = vmatpush.msra.mxu0 %v111
    %126 = vmatpush.msra.mxu0 %v107
    %127 = vmatpush.msra.mxu0 %v103
    %128 = vmatpush.msra.mxu0 %v99
    %129 = vmatpush.msra.mxu0 %v95
    %130 = vmatpush.msra.mxu0 %v91
    %131 = vmatpush.msra.mxu0 %v87
    %132 = vmatpush.msra.mxu0 %v83
    %133 = vmatpush.msra.mxu0 %v79
    %134 = vmatpush.msra.mxu0 %v75
    %135 = vmatpush.msra.mxu0 %v71
    %136 = vmatpush.msra.mxu0 %v67
    %137 = vmatpush.msra.mxu0 %v63
    %138 = vmatpush.msra.mxu0 %v59
    %139 = vmatmul.f32.gmra.mxu0 %v58
    %v140 = vpop.f32.mrf.mxu0
    %v141 = vadd.f32 0.0, %v140
    %142 = vdwg.mxu0
    %143 = vmatpush.msra.mxu0 %v120
    %144 = vmatpush.msra.mxu0 %v116
    %145 = vmatpush.msra.mxu0 %v112
    %146 = vmatpush.msra.mxu0 %v108
    %147 = vmatpush.msra.mxu0 %v104
    %148 = vmatpush.msra.mxu0 %v100
    %149 = vmatpush.msra.mxu0 %v96
    %150 = vmatpush.msra.mxu0 %v92
    %151 = vmatpush.msra.mxu0 %v88
    %152 = vmatpush.msra.mxu0 %v84
    %153 = vmatpush.msra.mxu0 %v80
    %154 = vmatpush.msra.mxu0 %v76
    %155 = vmatpush.msra.mxu0 %v72
    %156 = vmatpush.msra.mxu0 %v68
    %157 = vmatpush.msra.mxu0 %v64
    %158 = vmatpush.msra.mxu0 %v60
    %159 = vmatmul.f32.gmra.mxu0 %v58
    %v160 = vpop.f32.mrf.mxu0
    %v161 = vadd.f32 0.0, %v160
    %162 = vdwg.mxu0
    %163 = vmatpush.msra.mxu0 %v121
    %164 = vmatpush.msra.mxu0 %v117
    %165 = vmatpush.msra.mxu0 %v113
    %166 = vmatpush.msra.mxu0 %v109
    %167 = vmatpush.msra.mxu0 %v105
    %168 = vmatpush.msra.mxu0 %v101
    %169 = vmatpush.msra.mxu0 %v97
    %170 = vmatpush.msra.mxu0 %v93
    %171 = vmatpush.msra.mxu0 %v89
    %172 = vmatpush.msra.mxu0 %v85
    %173 = vmatpush.msra.mxu0 %v81
    %174 = vmatpush.msra.mxu0 %v77
    %175 = vmatpush.msra.mxu0 %v73
    %176 = vmatpush.msra.mxu0 %v69
    %177 = vmatpush.msra.mxu0 %v65
    %178 = vmatpush.msra.mxu0 %v61
    %179 = vmatmul.f32.gmra.mxu0 %v58
    %v180 = vpop.f32.mrf.mxu0
    %v181 = vadd.f32 0.0, %v180
    %182 = vdwg.mxu0
    %183 = vmatpush.msra.mxu0 %v122
    %184 = vmatpush.msra.mxu0 %v118
    %185 = vmatpush.msra.mxu0 %v114
    %186 = vmatpush.msra.mxu0 %v110
    %187 = vmatpush.msra.mxu0 %v106
    %188 = vmatpush.msra.mxu0 %v102
    %189 = vmatpush.msra.mxu0 %v98
    %190 = vmatpush.msra.mxu0 %v94
    %191 = vmatpush.msra.mxu0 %v90
    %192 = vmatpush.msra.mxu0 %v86
    %193 = vmatpush.msra.mxu0 %v82
    %194 = vmatpush.msra.mxu0 %v78
    %195 = vmatpush.msra.mxu0 %v74
    %196 = vmatpush.msra.mxu0 %v70
    %197 = vmatpush.msra.mxu0 %v66
    %198 = vmatpush.msra.mxu0 %v62
    %199 = vmatmul.f32.gmra.mxu0 %v58
    %v200 = vpop.f32.mrf.mxu0
    %v201 = vadd.f32 0.0, %v200
    %202 = vdwg.mxu0
    %v203 = vld [vmem:[%s1] sm:$0xf]
    %v204 = vld [vmem:[%s1 + $0x4] sm:$0xf]
    %vm205 = vcmask 64512
    %v207 = vsel %vm205, %v204, 0
    %209 = vmatpush.msra.mxu0 0.0
    %210 = vmatpush.msra.mxu0 0.0
    %211 = vmatpush.msra.mxu0 0.0
    %212 = vmatpush.msra.mxu0 0.0
    %213 = vmatpush.msra.mxu0 0.0
    %214 = vmatpush.msra.mxu0 0.0
    %215 = vmatpush.msra.mxu0 0.0
    %216 = vmatpush.msra.mxu0 0.0
    %217 = vmatpush.msra.mxu0 0.0
    %218 = vmatpush.msra.mxu0 0.0
    %219 = vmatpush.msra.mxu0 0.0
    %220 = vmatpush.msra.mxu0 0.0
    %221 = vmatpush.msra.mxu0 0.0
    %222 = vmatpush.msra.mxu0 0.0
    %223 = vmatpush.msra.mxu0 0.0
    %224 = vmatpush.msra.mxu0 %v161
    %225 = vmatmul.f32.gmra.mxu0 %v207
    %v226 = vpop.f32.mrf.mxu0
    %v227 = vadd.f32 0.0, %v226
    %228 = vdwg.mxu0
    %v230 = vsel %vm205, %v203, 0
    %232 = vmatpush.msra.mxu0 0.0
    %233 = vmatpush.msra.mxu0 0.0
    %234 = vmatpush.msra.mxu0 0.0
    %235 = vmatpush.msra.mxu0 0.0
    %236 = vmatpush.msra.mxu0 0.0
    %237 = vmatpush.msra.mxu0 0.0
    %238 = vmatpush.msra.mxu0 0.0
    %239 = vmatpush.msra.mxu0 0.0
    %240 = vmatpush.msra.mxu0 0.0
    %241 = vmatpush.msra.mxu0 0.0
    %242 = vmatpush.msra.mxu0 0.0
    %243 = vmatpush.msra.mxu0 0.0
    %244 = vmatpush.msra.mxu0 0.0
    %245 = vmatpush.msra.mxu0 0.0
    %246 = vmatpush.msra.mxu0 0.0
    %247 = vmatpush.msra.mxu0 %v141
    %248 = vmatmul.f32.gmra.mxu0 %v230
    %v249 = vpop.f32.mrf.mxu0
    %v250 = vadd.f32 %v227, %v249
    %251 = vdwg.mxu0
    %v252 = vld [vmem:[%s1 + $0x8] sm:$0xf]
    %v254 = vsel %vm205, %v252, 0
    %256 = vmatpush.msra.mxu0 0.0
    %257 = vmatpush.msra.mxu0 0.0
    %258 = vmatpush.msra.mxu0 0.0
    %259 = vmatpush.msra.mxu0 0.0
    %260 = vmatpush.msra.mxu0 0.0
    %261 = vmatpush.msra.mxu0 0.0
    %262 = vmatpush.msra.mxu0 0.0
    %263 = vmatpush.msra.mxu0 0.0
    %264 = vmatpush.msra.mxu0 0.0
    %265 = vmatpush.msra.mxu0 0.0
    %266 = vmatpush.msra.mxu0 0.0
    %267 = vmatpush.msra.mxu0 0.0
    %268 = vmatpush.msra.mxu0 0.0
    %269 = vmatpush.msra.mxu0 0.0
    %270 = vmatpush.msra.mxu0 0.0
    %271 = vmatpush.msra.mxu0 %v181
    %272 = vmatmul.f32.gmra.mxu0 %v254
    %v273 = vpop.f32.mrf.mxu0
    %v274 = vadd.f32 0.0, %v273
    %275 = vdwg.mxu0
    %v276 = vadd.f32 %v250, %v274
    %v277 = vld [vmem:[%s1 + $0xc] sm:$0xf]
    %v279 = vsel %vm205, %v277, 0
    %281 = vmatpush.msra.mxu0 0.0
    %282 = vmatpush.msra.mxu0 0.0
    %283 = vmatpush.msra.mxu0 0.0
    %284 = vmatpush.msra.mxu0 0.0
    %285 = vmatpush.msra.mxu0 0.0
    %286 = vmatpush.msra.mxu0 0.0
    %287 = vmatpush.msra.mxu0 0.0
    %288 = vmatpush.msra.mxu0 0.0
    %289 = vmatpush.msra.mxu0 0.0
    %290 = vmatpush.msra.mxu0 0.0
    %291 = vmatpush.msra.mxu0 0.0
    %292 = vmatpush.msra.mxu0 0.0
    %293 = vmatpush.msra.mxu0 0.0
    %294 = vmatpush.msra.mxu0 0.0
    %295 = vmatpush.msra.mxu0 0.0
    %296 = vmatpush.msra.mxu0 %v201
    %297 = vmatmul.f32.gmra.mxu0 %v279
    %v298 = vpop.f32.mrf.mxu0
    %v299 = vadd.f32 0.0, %v298
    %300 = vdwg.mxu0
    %v301 = vadd.f32 %v276, %v299
    %v302 = vmul.f32 %v301, 0.5
    %v303 = vmul.f32 %v301, %v301
    %v304 = vmul.f32 %v303, %v301
    %v305 = vmul.f32 %v304, 0.044715
    %v306 = vadd.f32 %v301, %v305
    %v307 = vmul.f32 %v306, 0.7978846
    %v308 = vtanh.pop %v307
    %v309 = vadd.f32 %v308, 1.0
    %v310 = vmul.f32 %v302, %v309
    %v311 = vsub.f32 0.0, %v310
    %v312 = vmul.f32 %v311, 1.442695
    %v313 = vpow.pop %v312
    %v314 = vadd.f32 %v313, 1.0
    %v315 = vrcp.pop %v314
    %v316 = vmul.f32 %v314, %v315
    %v317 = vsub.f32 1.0, %v316
    %v318 = vmul.f32 %v315, %v317
    %v319 = vadd.f32 %v315, %v318
    %vm320 = vweird.f32 %v314
    %vm321 = vweird.f32 %v315
    %vm322 = vmor %vm320, %vm321
    %v323 = vsel %vm322, %v315, %v319
    %v324 = vand.u32 2147483647, %v314
    %vm325 = vcmp.eq.f32.partialorder %v324, 8.507059e+37
    %v326 = vand.u32 %v314, 2147483648
    %v327 = vor.u32 1.1754944e-38, %v326
    %v328 = vsel %vm325, %v327, %v323
    %v329 = vmul.f32 1.0, %v328
    %v330 = vadd.f32 %v329, 1.0
    %v331 = vlaneseq
    %v332 = vand.u32 %v331, 127
    %vm333 = vcmp.lt.s32.totalorder %v332, 108
    %v334 = vsel %vm333, 1, 0
    %v335 = vcvt.s32.f32 %v334
    %v336 = vmul.f32 %v330, %v335
    %vm337 = vcmask 1043456
    %v338 = vsel %vm337, %v336, 0.0
    %339 = vadd.xlane.f32.xlu0 %v338
    %v340 = vpop.xlane.xlu0 %339
    %v341 = vmul.f32 %v340, 0.009259259
    %v342 = vsub.f32 %v330, %v341
    %v343 = vmul.f32 %v342, %v342
    %v344 = vmul.f32 %v343, %v335
    %v345 = vsel %vm337, %v344, 0.0
    %346 = vadd.xlane.f32.xlu0 %v345
    %v347 = vpop.xlane.xlu0 %346
    %v348 = vmul.f32 %v347, 0.009259259
    %v349 = vadd.f32 %v348, 0.0009999999
    %v350 = vrsqrt.pop %v349
    %v351 = vmul.f32 %v350, %v349
    %v352 = vmul.f32 %v351, %v350
    %v353 = vmul.f32 0.5, %v352
    %v354 = vsub.f32 1.5, %v353
    %v355 = vmul.f32 %v350, %v354
    %vm356 = vweird.f32 %v349
    %vm357 = vweird.f32 %v350
    %vm358 = vmor %vm356, %vm357
    %v359 = vsel %vm358, %v350, %v355
    %v360 = vmul.f32 %v342, %v359
    %v361 = vld [vmem:[%s5] sm:$0xf]
    %363 = vset.pattern.permute.xlu0 0
    %364 = vperm.xlu0 %363, %v361
    %v365 = vpop.permute.xlu0 %364
    %v367 = vmul.f32 %v360, %v365
    %v368 = vld [vmem:[%s6] sm:$0xf]
    %370 = vset.pattern.permute.xlu0 0
    %371 = vperm.xlu0 %370, %v368
    %v372 = vpop.permute.xlu0 %371
    %v374 = vadd.f32 %v367, %v372
    %v375 = vsel %vm337, %v374, 0.0
    %v376 = vpack.c.bf16 %v375, %v375
    %v377 = vld [vmem:[#allocation4] sm:$0xff]
    %v378 = vld [vmem:[#allocation4 + $0x8] sm:$0xff]
    %v379 = vld [vmem:[#allocation4 + $0x10] sm:$0xff]
    %v380 = vld [vmem:[#allocation4 + $0x18] sm:$0xff]
    %v381 = vld [vmem:[#allocation4 + $0x20] sm:$0xff]
    %v382 = vld [vmem:[#allocation4 + $0x28] sm:$0xff]
    %v383 = vld [vmem:[#allocation4 + $0x30] sm:$0xff]
    %v384 = vld [vmem:[#allocation4 + $0x38] sm:$0xff]
    %v385 = vld [vmem:[#allocation4 + $0x40] sm:$0xff]
    %v386 = vld [vmem:[#allocation4 + $0x48] sm:$0xff]
    %v387 = vld [vmem:[#allocation4 + $0x50] sm:$0xff]
    %v388 = vld [vmem:[#allocation4 + $0x58] sm:$0xff]
    %v389 = vld [vmem:[#allocation4 + $0x60] sm:$0xff]
    %v390 = vld [vmem:[#allocation4 + $0x68] sm:$0xff]
    %v391 = vld [vmem:[#allocation4 + $0x70] sm:$0xff]
    %v392 = vld [vmem:[#allocation4 + $0x78] sm:$0xff]
    %v393 = vld [vmem:[#allocation4 + $0x80] sm:$0xff]
    %v394 = vld [vmem:[#allocation4 + $0x88] sm:$0xff]
    %v395 = vld [vmem:[#allocation4 + $0x90] sm:$0xff]
    %v396 = vld [vmem:[#allocation4 + $0x98] sm:$0xff]
    %v397 = vld [vmem:[#allocation4 + $0xa0] sm:$0xff]
    %v398 = vld [vmem:[#allocation4 + $0xa8] sm:$0xff]
    %v399 = vld [vmem:[#allocation4 + $0xb0] sm:$0xff]
    %v400 = vld [vmem:[#allocation4 + $0xb8] sm:$0xff]
    %v401 = vld [vmem:[#allocation4 + $0xc0] sm:$0xff]
    %v402 = vld [vmem:[#allocation4 + $0xc8] sm:$0xff]
    %v403 = vld [vmem:[#allocation4 + $0xd0] sm:$0xff]
    %v404 = vld [vmem:[#allocation4 + $0xd8] sm:$0xff]
    %v405 = vld [vmem:[#allocation4 + $0xe0] sm:$0xff]
    %v406 = vld [vmem:[#allocation4 + $0xe8] sm:$0xff]
    %v407 = vld [vmem:[#allocation4 + $0xf0] sm:$0xff]
    %v408 = vld [vmem:[#allocation4 + $0xf8] sm:$0xff]
    %v409 = vld [vmem:[#allocation4 + $0x100] sm:$0xff]
    %v410 = vld [vmem:[#allocation4 + $0x108] sm:$0xff]
    %v411 = vld [vmem:[#allocation4 + $0x110] sm:$0xff]
    %v412 = vld [vmem:[#allocation4 + $0x118] sm:$0xff]
    %v413 = vld [vmem:[#allocation4 + $0x120] sm:$0xff]
    %v414 = vld [vmem:[#allocation4 + $0x128] sm:$0xff]
    %v415 = vld [vmem:[#allocation4 + $0x130] sm:$0xff]
    %v416 = vld [vmem:[#allocation4 + $0x138] sm:$0xff]
    %v417 = vld [vmem:[#allocation4 + $0x140] sm:$0xff]
    %v418 = vld [vmem:[#allocation4 + $0x148] sm:$0xff]
    %v419 = vld [vmem:[#allocation4 + $0x150] sm:$0xff]
    %v420 = vld [vmem:[#allocation4 + $0x158] sm:$0xff]
    %v421 = vld [vmem:[#allocation4 + $0x160] sm:$0xff]
    %v422 = vld [vmem:[#allocation4 + $0x168] sm:$0xff]
    %v423 = vld [vmem:[#allocation4 + $0x170] sm:$0xff]
    %v424 = vld [vmem:[#allocation4 + $0x178] sm:$0xff]
    %v425 = vld [vmem:[#allocation4 + $0x180] sm:$0xff]
    %v426 = vld [vmem:[#allocation4 + $0x188] sm:$0xff]
    %v427 = vld [vmem:[#allocation4 + $0x190] sm:$0xff]
    %v428 = vld [vmem:[#allocation4 + $0x198] sm:$0xff]
    %v429 = vld [vmem:[#allocation4 + $0x1a0] sm:$0xff]
    %v430 = vld [vmem:[#allocation4 + $0x1a8] sm:$0xff]
    %v431 = vld [vmem:[#allocation4 + $0x1b0] sm:$0xff]
    %v432 = vld [vmem:[#allocation4 + $0x1b8] sm:$0xff]
    %v433 = vld [vmem:[#allocation4 + $0x1c0] sm:$0xff]
    %v434 = vld [vmem:[#allocation4 + $0x1c8] sm:$0xff]
    %v435 = vld [vmem:[#allocation4 + $0x1d0] sm:$0xff]
    %v436 = vld [vmem:[#allocation4 + $0x1d8] sm:$0xff]
    %v437 = vld [vmem:[#allocation4 + $0x1e0] sm:$0xff]
    %v438 = vld [vmem:[#allocation4 + $0x1e8] sm:$0xff]
    %v439 = vld [vmem:[#allocation4 + $0x1f0] sm:$0xff]
    %v440 = vld [vmem:[#allocation4 + $0x1f8] sm:$0xff]
    %v441 = vld [vmem:[#allocation4 + $0x200] sm:$0xff]
    %v442 = vld [vmem:[#allocation4 + $0x208] sm:$0xff]
    %v443 = vld [vmem:[#allocation4 + $0x210] sm:$0xff]
    %v444 = vld [vmem:[#allocation4 + $0x218] sm:$0xff]
    %v445 = vld [vmem:[#allocation4 + $0x220] sm:$0xff]
    %v446 = vld [vmem:[#allocation4 + $0x228] sm:$0xff]
    %v447 = vld [vmem:[#allocation4 + $0x230] sm:$0xff]
    %v448 = vld [vmem:[#allocation4 + $0x238] sm:$0xff]
    %v449 = vld [vmem:[#allocation4 + $0x240] sm:$0xff]
    %v450 = vld [vmem:[#allocation4 + $0x248] sm:$0xff]
    %v451 = vld [vmem:[#allocation4 + $0x250] sm:$0xff]
    %v452 = vld [vmem:[#allocation4 + $0x258] sm:$0xff]
    %v453 = vld [vmem:[#allocation4 + $0x260] sm:$0xff]
    %v454 = vld [vmem:[#allocation4 + $0x268] sm:$0xff]
    %v455 = vld [vmem:[#allocation4 + $0x270] sm:$0xff]
    %v456 = vld [vmem:[#allocation4 + $0x278] sm:$0xff]
    %v457 = vld [vmem:[#allocation4 + $0x280] sm:$0xff]
    %v458 = vld [vmem:[#allocation4 + $0x288] sm:$0xff]
    %v459 = vld [vmem:[#allocation4 + $0x290] sm:$0xff]
    %v460 = vld [vmem:[#allocation4 + $0x298] sm:$0xff]
    %v461 = vld [vmem:[#allocation4 + $0x2a0] sm:$0xff]
    %v462 = vld [vmem:[#allocation4 + $0x2a8] sm:$0xff]
    %v463 = vld [vmem:[#allocation4 + $0x2b0] sm:$0xff]
    %v464 = vld [vmem:[#allocation4 + $0x2b8] sm:$0xff]
    %v465 = vld [vmem:[#allocation4 + $0x2c0] sm:$0xff]
    %v466 = vld [vmem:[#allocation4 + $0x2c8] sm:$0xff]
    %v467 = vld [vmem:[#allocation4 + $0x2d0] sm:$0xff]
    %v468 = vld [vmem:[#allocation4 + $0x2d8] sm:$0xff]
    %v469 = vld [vmem:[#allocation4 + $0x2e0] sm:$0xff]
    %v470 = vld [vmem:[#allocation4 + $0x2e8] sm:$0xff]
    %v471 = vld [vmem:[#allocation4 + $0x2f0] sm:$0xff]
    %v472 = vld [vmem:[#allocation4 + $0x2f8] sm:$0xff]
    %v473 = vld [vmem:[#allocation4 + $0x300] sm:$0xff]
    %v474 = vld [vmem:[#allocation4 + $0x308] sm:$0xff]
    %v475 = vld [vmem:[#allocation4 + $0x310] sm:$0xff]
    %v476 = vld [vmem:[#allocation4 + $0x318] sm:$0xff]
    %v477 = vld [vmem:[#allocation4 + $0x320] sm:$0xff]
    %v478 = vld [vmem:[#allocation4 + $0x328] sm:$0xff]
    %v479 = vld [vmem:[#allocation4 + $0x330] sm:$0xff]
    %v480 = vld [vmem:[#allocation4 + $0x338] sm:$0xff]
    %v481 = vld [vmem:[#allocation4 + $0x340] sm:$0xff]
    %v482 = vld [vmem:[#allocation4 + $0x348] sm:$0xff]
    %v483 = vld [vmem:[#allocation4 + $0x350] sm:$0xff]
    %v484 = vld [vmem:[#allocation4 + $0x358] sm:$0xff]
    %v485 = vld [vmem:[#allocation4 + $0x360] sm:$0xff]
    %v486 = vld [vmem:[#allocation4 + $0x368] sm:$0xff]
    %v487 = vld [vmem:[#allocation4 + $0x370] sm:$0xff]
    %v488 = vld [vmem:[#allocation4 + $0x378] sm:$0xff]
    %v489 = vld [vmem:[#allocation4 + $0x380] sm:$0xff]
    %v490 = vld [vmem:[#allocation4 + $0x388] sm:$0xff]
    %v491 = vld [vmem:[#allocation4 + $0x390] sm:$0xff]
    %v492 = vld [vmem:[#allocation4 + $0x398] sm:$0xff]
    %v493 = vld [vmem:[#allocation4 + $0x3a0] sm:$0xff]
    %v494 = vld [vmem:[#allocation4 + $0x3a8] sm:$0xff]
    %v495 = vld [vmem:[#allocation4 + $0x3b0] sm:$0xff]
    %v496 = vld [vmem:[#allocation4 + $0x3b8] sm:$0xff]
    %v497 = vld [vmem:[#allocation4 + $0x3c0] sm:$0xff]
    %v498 = vld [vmem:[#allocation4 + $0x3c8] sm:$0xff]
    %v499 = vld [vmem:[#allocation4 + $0x3d0] sm:$0xff]
    %v500 = vld [vmem:[#allocation4 + $0x3d8] sm:$0xff]
    %v501 = vld [vmem:[#allocation4 + $0x3e0] sm:$0xff]
    %v502 = vld [vmem:[#allocation4 + $0x3e8] sm:$0xff]
    %v503 = vld [vmem:[#allocation4 + $0x3f0] sm:$0xff]
    %v504 = vld [vmem:[#allocation4 + $0x3f8] sm:$0xff]
    %v505 = vld [vmem:[#allocation4 + $0x400] sm:$0xff]
    %v506 = vld [vmem:[#allocation4 + $0x408] sm:$0xff]
    %v507 = vld [vmem:[#allocation4 + $0x410] sm:$0xff]
    %v508 = vld [vmem:[#allocation4 + $0x418] sm:$0xff]
    %v509 = vld [vmem:[#allocation4 + $0x420] sm:$0xff]
    %v510 = vld [vmem:[#allocation4 + $0x428] sm:$0xff]
    %v511 = vld [vmem:[#allocation4 + $0x430] sm:$0xff]
    %v512 = vld [vmem:[#allocation4 + $0x438] sm:$0xff]
    %v513 = vld [vmem:[#allocation4 + $0x440] sm:$0xff]
    %v514 = vld [vmem:[#allocation4 + $0x448] sm:$0xff]
    %v515 = vld [vmem:[#allocation4 + $0x450] sm:$0xff]
    %v516 = vld [vmem:[#allocation4 + $0x458] sm:$0xff]
    %v517 = vld [vmem:[#allocation4 + $0x460] sm:$0xff]
    %v518 = vld [vmem:[#allocation4 + $0x468] sm:$0xff]
    %v519 = vld [vmem:[#allocation4 + $0x470] sm:$0xff]
    %v520 = vld [vmem:[#allocation4 + $0x478] sm:$0xff]
    %v665 = vunpack.c.l.b16 %v377
    %v666 = vunpack.c.h.b16 %v377
    %v667 = vunpack.c.l.b16 %v378
    %v668 = vunpack.c.h.b16 %v378
    %v669 = vunpack.c.l.b16 %v379
    %v670 = vunpack.c.h.b16 %v379
    %v671 = vunpack.c.l.b16 %v380
    %v672 = vunpack.c.h.b16 %v380
    %v673 = vunpack.c.l.b16 %v381
    %v674 = vunpack.c.h.b16 %v381
    %v675 = vunpack.c.l.b16 %v382
    %v676 = vunpack.c.h.b16 %v382
    %v677 = vunpack.c.l.b16 %v383
    %v678 = vunpack.c.h.b16 %v383
    %v679 = vunpack.c.l.b16 %v384
    %v680 = vunpack.c.h.b16 %v384
    %v681 = vunpack.c.l.b16 %v385
    %v682 = vunpack.c.h.b16 %v385
    %v683 = vunpack.c.l.b16 %v386
    %v684 = vunpack.c.h.b16 %v386
    %v685 = vunpack.c.l.b16 %v387
    %v686 = vunpack.c.h.b16 %v387
    %v687 = vunpack.c.l.b16 %v388
    %v688 = vunpack.c.h.b16 %v388
    %v689 = vunpack.c.l.b16 %v389
    %v690 = vunpack.c.h.b16 %v389
    %v691 = vunpack.c.l.b16 %v390
    %v692 = vunpack.c.h.b16 %v390
    %v693 = vunpack.c.l.b16 %v391
    %v694 = vunpack.c.h.b16 %v391
    %v695 = vunpack.c.l.b16 %v392
    %v696 = vunpack.c.h.b16 %v392
    %v697 = vunpack.c.l.b16 %v393
    %v698 = vunpack.c.h.b16 %v393
    %v699 = vunpack.c.l.b16 %v394
    %v700 = vunpack.c.h.b16 %v394
    %v701 = vunpack.c.l.b16 %v395
    %v702 = vunpack.c.h.b16 %v395
    %v703 = vunpack.c.l.b16 %v396
    %v704 = vunpack.c.h.b16 %v396
    %v705 = vunpack.c.l.b16 %v397
    %v706 = vunpack.c.h.b16 %v397
    %v707 = vunpack.c.l.b16 %v398
    %v708 = vunpack.c.h.b16 %v398
    %v709 = vunpack.c.l.b16 %v399
    %v710 = vunpack.c.h.b16 %v399
    %v711 = vunpack.c.l.b16 %v400
    %v712 = vunpack.c.h.b16 %v400
    %v713 = vunpack.c.l.b16 %v401
    %v714 = vunpack.c.h.b16 %v401
    %v715 = vunpack.c.l.b16 %v402
    %v716 = vunpack.c.h.b16 %v402
    %v717 = vunpack.c.l.b16 %v403
    %v718 = vunpack.c.h.b16 %v403
    %v719 = vunpack.c.l.b16 %v404
    %v720 = vunpack.c.h.b16 %v404
    %v721 = vunpack.c.l.b16 %v405
    %v722 = vunpack.c.h.b16 %v405
    %v723 = vunpack.c.l.b16 %v406
    %v724 = vunpack.c.h.b16 %v406
    %v725 = vunpack.c.l.b16 %v407
    %v726 = vunpack.c.h.b16 %v407
    %v727 = vunpack.c.l.b16 %v408
    %v728 = vunpack.c.h.b16 %v408
    %v729 = vunpack.c.l.b16 %v409
    %v730 = vunpack.c.h.b16 %v409
    %v731 = vunpack.c.l.b16 %v410
    %v732 = vunpack.c.h.b16 %v410
    %v733 = vunpack.c.l.b16 %v411
    %v734 = vunpack.c.h.b16 %v411
    %v735 = vunpack.c.l.b16 %v412
    %v736 = vunpack.c.h.b16 %v412
    %v737 = vunpack.c.l.b16 %v413
    %v738 = vunpack.c.h.b16 %v413
    %v739 = vunpack.c.l.b16 %v414
    %v740 = vunpack.c.h.b16 %v414
    %v741 = vunpack.c.l.b16 %v415
    %v742 = vunpack.c.h.b16 %v415
    %v743 = vunpack.c.l.b16 %v416
    %v744 = vunpack.c.h.b16 %v416
    %v745 = vunpack.c.l.b16 %v417
    %v746 = vunpack.c.h.b16 %v417
    %v747 = vunpack.c.l.b16 %v418
    %v748 = vunpack.c.h.b16 %v418
    %v749 = vunpack.c.l.b16 %v419
    %v750 = vunpack.c.h.b16 %v419
    %v751 = vunpack.c.l.b16 %v420
    %v752 = vunpack.c.h.b16 %v420
    %v753 = vunpack.c.l.b16 %v421
    %v754 = vunpack.c.h.b16 %v421
    %v755 = vunpack.c.l.b16 %v422
    %v756 = vunpack.c.h.b16 %v422
    %v757 = vunpack.c.l.b16 %v423
    %v758 = vunpack.c.h.b16 %v423
    %v759 = vunpack.c.l.b16 %v424
    %v760 = vunpack.c.h.b16 %v424
    %v761 = vunpack.c.l.b16 %v425
    %v762 = vunpack.c.h.b16 %v425
    %v763 = vunpack.c.l.b16 %v426
    %v764 = vunpack.c.h.b16 %v426
    %v765 = vunpack.c.l.b16 %v427
    %v766 = vunpack.c.h.b16 %v427
    %v767 = vunpack.c.l.b16 %v428
    %v768 = vunpack.c.h.b16 %v428
    %v769 = vunpack.c.l.b16 %v429
    %v770 = vunpack.c.h.b16 %v429
    %v771 = vunpack.c.l.b16 %v430
    %v772 = vunpack.c.h.b16 %v430
    %v773 = vunpack.c.l.b16 %v431
    %v774 = vunpack.c.h.b16 %v431
    %v775 = vunpack.c.l.b16 %v432
    %v776 = vunpack.c.h.b16 %v432
    %v777 = vunpack.c.l.b16 %v433
    %v778 = vunpack.c.h.b16 %v433
    %v779 = vunpack.c.l.b16 %v434
    %v780 = vunpack.c.h.b16 %v434
    %v781 = vunpack.c.l.b16 %v435
    %v782 = vunpack.c.h.b16 %v435
    %v783 = vunpack.c.l.b16 %v436
    %v784 = vunpack.c.h.b16 %v436
    %v785 = vunpack.c.l.b16 %v437
    %v786 = vunpack.c.h.b16 %v437
    %v787 = vunpack.c.l.b16 %v438
    %v788 = vunpack.c.h.b16 %v438
    %v789 = vunpack.c.l.b16 %v439
    %v790 = vunpack.c.h.b16 %v439
    %v791 = vunpack.c.l.b16 %v440
    %v792 = vunpack.c.h.b16 %v440
    %v793 = vunpack.c.l.b16 %v441
    %v794 = vunpack.c.h.b16 %v441
    %v795 = vunpack.c.l.b16 %v442
    %v796 = vunpack.c.h.b16 %v442
    %v797 = vunpack.c.l.b16 %v443
    %v798 = vunpack.c.h.b16 %v443
    %v799 = vunpack.c.l.b16 %v444
    %v800 = vunpack.c.h.b16 %v444
    %v801 = vunpack.c.l.b16 %v445
    %v802 = vunpack.c.h.b16 %v445
    %v803 = vunpack.c.l.b16 %v446
    %v804 = vunpack.c.h.b16 %v446
    %v805 = vunpack.c.l.b16 %v447
    %v806 = vunpack.c.h.b16 %v447
    %v807 = vunpack.c.l.b16 %v448
    %v808 = vunpack.c.h.b16 %v448
    %v809 = vunpack.c.l.b16 %v449
    %v810 = vunpack.c.h.b16 %v449
    %v811 = vunpack.c.l.b16 %v450
    %v812 = vunpack.c.h.b16 %v450
    %v813 = vunpack.c.l.b16 %v451
    %v814 = vunpack.c.h.b16 %v451
    %v815 = vunpack.c.l.b16 %v452
    %v816 = vunpack.c.h.b16 %v452
    %v817 = vunpack.c.l.b16 %v453
    %v818 = vunpack.c.h.b16 %v453
    %v819 = vunpack.c.l.b16 %v454
    %v820 = vunpack.c.h.b16 %v454
    %v821 = vunpack.c.l.b16 %v455
    %v822 = vunpack.c.h.b16 %v455
    %v823 = vunpack.c.l.b16 %v456
    %v824 = vunpack.c.h.b16 %v456
    %v825 = vunpack.c.l.b16 %v457
    %v826 = vunpack.c.h.b16 %v457
    %v827 = vunpack.c.l.b16 %v458
    %v828 = vunpack.c.h.b16 %v458
    %v829 = vunpack.c.l.b16 %v459
    %v830 = vunpack.c.h.b16 %v459
    %v831 = vunpack.c.l.b16 %v460
    %v832 = vunpack.c.h.b16 %v460
    %v833 = vunpack.c.l.b16 %v461
    %v834 = vunpack.c.h.b16 %v461
    %v835 = vunpack.c.l.b16 %v462
    %v836 = vunpack.c.h.b16 %v462
    %v837 = vunpack.c.l.b16 %v463
    %v838 = vunpack.c.h.b16 %v463
    %v839 = vunpack.c.l.b16 %v464
    %v840 = vunpack.c.h.b16 %v464
    %v841 = vunpack.c.l.b16 %v465
    %v842 = vunpack.c.h.b16 %v465
    %v843 = vunpack.c.l.b16 %v466
    %v844 = vunpack.c.h.b16 %v466
    %v845 = vunpack.c.l.b16 %v467
    %v846 = vunpack.c.h.b16 %v467
    %v847 = vunpack.c.l.b16 %v468
    %v848 = vunpack.c.h.b16 %v468
    %v849 = vunpack.c.l.b16 %v469
    %v850 = vunpack.c.h.b16 %v469
    %v851 = vunpack.c.l.b16 %v470
    %v852 = vunpack.c.h.b16 %v470
    %v853 = vunpack.c.l.b16 %v471
    %v854 = vunpack.c.h.b16 %v471
    %v855 = vunpack.c.l.b16 %v472
    %v856 = vunpack.c.h.b16 %v472
    %v857 = vunpack.c.l.b16 %v473
    %v858 = vunpack.c.h.b16 %v473
    %v859 = vunpack.c.l.b16 %v474
    %v860 = vunpack.c.h.b16 %v474
    %v861 = vunpack.c.l.b16 %v475
    %v862 = vunpack.c.h.b16 %v475
    %v863 = vunpack.c.l.b16 %v476
    %v864 = vunpack.c.h.b16 %v476
    %v865 = vunpack.c.l.b16 %v477
    %v866 = vunpack.c.h.b16 %v477
    %v867 = vunpack.c.l.b16 %v478
    %v868 = vunpack.c.h.b16 %v478
    %v869 = vunpack.c.l.b16 %v479
    %v870 = vunpack.c.h.b16 %v479
    %v871 = vunpack.c.l.b16 %v480
    %v872 = vunpack.c.h.b16 %v480
    %v873 = vunpack.c.l.b16 %v481
    %v874 = vunpack.c.h.b16 %v481
    %v875 = vunpack.c.l.b16 %v482
    %v876 = vunpack.c.h.b16 %v482
    %v877 = vunpack.c.l.b16 %v483
    %v878 = vunpack.c.h.b16 %v483
    %v879 = vunpack.c.l.b16 %v484
    %v880 = vunpack.c.h.b16 %v484
    %v881 = vunpack.c.l.b16 %v485
    %v882 = vunpack.c.h.b16 %v485
    %v883 = vunpack.c.l.b16 %v486
    %v884 = vunpack.c.h.b16 %v486
    %v885 = vunpack.c.l.b16 %v487
    %v886 = vunpack.c.h.b16 %v487
    %v887 = vunpack.c.l.b16 %v488
    %v888 = vunpack.c.h.b16 %v488
    %v889 = vunpack.c.l.b16 %v489
    %v890 = vunpack.c.h.b16 %v489
    %v891 = vunpack.c.l.b16 %v490
    %v892 = vunpack.c.h.b16 %v490
    %v893 = vunpack.c.l.b16 %v491
    %v894 = vunpack.c.h.b16 %v491
    %v895 = vunpack.c.l.b16 %v492
    %v896 = vunpack.c.h.b16 %v492
    %v897 = vunpack.c.l.b16 %v493
    %v898 = vunpack.c.h.b16 %v493
    %v899 = vunpack.c.l.b16 %v494
    %v900 = vunpack.c.h.b16 %v494
    %v901 = vunpack.c.l.b16 %v495
    %v902 = vunpack.c.h.b16 %v495
    %v903 = vunpack.c.l.b16 %v496
    %v904 = vunpack.c.h.b16 %v496
    %v905 = vunpack.c.l.b16 %v497
    %v906 = vunpack.c.h.b16 %v497
    %v907 = vunpack.c.l.b16 %v498
    %v908 = vunpack.c.h.b16 %v498
    %v909 = vunpack.c.l.b16 %v499
    %v910 = vunpack.c.h.b16 %v499
    %v911 = vunpack.c.l.b16 %v500
    %v912 = vunpack.c.h.b16 %v500
    %v913 = vunpack.c.l.b16 %v501
    %v914 = vunpack.c.h.b16 %v501
    %v915 = vunpack.c.l.b16 %v502
    %v916 = vunpack.c.h.b16 %v502
    %v917 = vunpack.c.l.b16 %v503
    %v918 = vunpack.c.h.b16 %v503
    %v919 = vunpack.c.l.b16 %v504
    %v920 = vunpack.c.h.b16 %v504
    %v921 = vunpack.c.l.b16 %v505
    %v922 = vunpack.c.h.b16 %v505
    %v923 = vunpack.c.l.b16 %v506
    %v924 = vunpack.c.h.b16 %v506
    %v925 = vunpack.c.l.b16 %v507
    %v926 = vunpack.c.h.b16 %v507
    %v927 = vunpack.c.l.b16 %v508
    %v928 = vunpack.c.h.b16 %v508
    %v929 = vunpack.c.l.b16 %v509
    %v930 = vunpack.c.h.b16 %v509
    %v931 = vunpack.c.l.b16 %v510
    %v932 = vunpack.c.h.b16 %v510
    %v933 = vunpack.c.l.b16 %v511
    %v934 = vunpack.c.h.b16 %v511
    %v935 = vunpack.c.l.b16 %v512
    %v936 = vunpack.c.h.b16 %v512
    %v937 = vunpack.c.l.b16 %v513
    %v938 = vunpack.c.h.b16 %v513
    %v939 = vunpack.c.l.b16 %v514
    %v940 = vunpack.c.h.b16 %v514
    %v941 = vunpack.c.l.b16 %v515
    %v942 = vunpack.c.h.b16 %v515
    %v943 = vunpack.c.l.b16 %v516
    %v944 = vunpack.c.h.b16 %v516
    %v945 = vunpack.c.l.b16 %v517
    %v946 = vunpack.c.h.b16 %v517
    %v947 = vunpack.c.l.b16 %v518
    %v948 = vunpack.c.h.b16 %v518
    %v949 = vunpack.c.l.b16 %v519
    %v950 = vunpack.c.h.b16 %v519
    %v951 = vunpack.c.l.b16 %v520
    %v952 = vunpack.c.h.b16 %v520
    %v953 = vpack.c.b16 %v683, %v665
    %v954 = vpack.c.b16 %v684, %v666
    %v955 = vpack.c.b16 %v685, %v667
    %v956 = vpack.c.b16 %v686, %v668
    %v957 = vpack.c.b16 %v687, %v669
    %v958 = vpack.c.b16 %v688, %v670
    %v959 = vpack.c.b16 %v689, %v671
    %v960 = vpack.c.b16 %v690, %v672
    %v961 = vpack.c.b16 %v691, %v673
    %v962 = vpack.c.b16 %v692, %v674
    %v963 = vpack.c.b16 %v693, %v675
    %v964 = vpack.c.b16 %v694, %v676
    %v965 = vpack.c.b16 %v695, %v677
    %v966 = vpack.c.b16 %v696, %v678
    %v967 = vpack.c.b16 %v697, %v679
    %v968 = vpack.c.b16 %v698, %v680
    %v969 = vpack.c.b16 %v699, %v681
    %v970 = vpack.c.b16 %v700, %v682
    %v971 = vpack.c.b16 %v719, %v701
    %v972 = vpack.c.b16 %v720, %v702
    %v973 = vpack.c.b16 %v721, %v703
    %v974 = vpack.c.b16 %v722, %v704
    %v975 = vpack.c.b16 %v723, %v705
    %v976 = vpack.c.b16 %v724, %v706
    %v977 = vpack.c.b16 %v725, %v707
    %v978 = vpack.c.b16 %v726, %v708
    %v979 = vpack.c.b16 %v727, %v709
    %v980 = vpack.c.b16 %v728, %v710
    %v981 = vpack.c.b16 %v729, %v711
    %v982 = vpack.c.b16 %v730, %v712
    %v983 = vpack.c.b16 %v731, %v713
    %v984 = vpack.c.b16 %v732, %v714
    %v985 = vpack.c.b16 %v733, %v715
    %v986 = vpack.c.b16 %v734, %v716
    %v987 = vpack.c.b16 %v735, %v717
    %v988 = vpack.c.b16 %v736, %v718
    %v989 = vpack.c.b16 %v755, %v737
    %v990 = vpack.c.b16 %v756, %v738
    %v991 = vpack.c.b16 %v757, %v739
    %v992 = vpack.c.b16 %v758, %v740
    %v993 = vpack.c.b16 %v759, %v741
    %v994 = vpack.c.b16 %v760, %v742
    %v995 = vpack.c.b16 %v761, %v743
    %v996 = vpack.c.b16 %v762, %v744
    %v997 = vpack.c.b16 %v763, %v745
    %v998 = vpack.c.b16 %v764, %v746
    %v999 = vpack.c.b16 %v765, %v747
    %v1000 = vpack.c.b16 %v766, %v748
    %v1001 = vpack.c.b16 %v767, %v749
    %v1002 = vpack.c.b16 %v768, %v750
    %v1003 = vpack.c.b16 %v769, %v751
    %v1004 = vpack.c.b16 %v770, %v752
    %v1005 = vpack.c.b16 %v771, %v753
    %v1006 = vpack.c.b16 %v772, %v754
    %v1007 = vpack.c.b16 %v791, %v773
    %v1008 = vpack.c.b16 %v792, %v774
    %v1009 = vpack.c.b16 %v793, %v775
    %v1010 = vpack.c.b16 %v794, %v776
    %v1011 = vpack.c.b16 %v795, %v777
    %v1012 = vpack.c.b16 %v796, %v778
    %v1013 = vpack.c.b16 %v797, %v779
    %v1014 = vpack.c.b16 %v798, %v780
    %v1015 = vpack.c.b16 %v799, %v781
    %v1016 = vpack.c.b16 %v800, %v782
    %v1017 = vpack.c.b16 %v801, %v783
    %v1018 = vpack.c.b16 %v802, %v784
    %v1019 = vpack.c.b16 %v803, %v785
    %v1020 = vpack.c.b16 %v804, %v786
    %v1021 = vpack.c.b16 %v805, %v787
    %v1022 = vpack.c.b16 %v806, %v788
    %v1023 = vpack.c.b16 %v807, %v789
    %v1024 = vpack.c.b16 %v808, %v790
    %v1025 = vpack.c.b16 %v827, %v809
    %v1026 = vpack.c.b16 %v828, %v810
    %v1027 = vpack.c.b16 %v829, %v811
    %v1028 = vpack.c.b16 %v830, %v812
    %v1029 = vpack.c.b16 %v831, %v813
    %v1030 = vpack.c.b16 %v832, %v814
    %v1031 = vpack.c.b16 %v833, %v815
    %v1032 = vpack.c.b16 %v834, %v816
    %v1033 = vpack.c.b16 %v835, %v817
    %v1034 = vpack.c.b16 %v836, %v818
    %v1035 = vpack.c.b16 %v837, %v819
    %v1036 = vpack.c.b16 %v838, %v820
    %v1037 = vpack.c.b16 %v839, %v821
    %v1038 = vpack.c.b16 %v840, %v822
    %v1039 = vpack.c.b16 %v841, %v823
    %v1040 = vpack.c.b16 %v842, %v824
    %v1041 = vpack.c.b16 %v843, %v825
    %v1042 = vpack.c.b16 %v844, %v826
    %v1043 = vpack.c.b16 %v863, %v845
    %v1044 = vpack.c.b16 %v864, %v846
    %v1045 = vpack.c.b16 %v865, %v847
    %v1046 = vpack.c.b16 %v866, %v848
    %v1047 = vpack.c.b16 %v867, %v849
    %v1048 = vpack.c.b16 %v868, %v850
    %v1049 = vpack.c.b16 %v869, %v851
    %v1050 = vpack.c.b16 %v870, %v852
    %v1051 = vpack.c.b16 %v871, %v853
    %v1052 = vpack.c.b16 %v872, %v854
    %v1053 = vpack.c.b16 %v873, %v855
    %v1054 = vpack.c.b16 %v874, %v856
    %v1055 = vpack.c.b16 %v875, %v857
    %v1056 = vpack.c.b16 %v876, %v858
    %v1057 = vpack.c.b16 %v877, %v859
    %v1058 = vpack.c.b16 %v878, %v860
    %v1059 = vpack.c.b16 %v879, %v861
    %v1060 = vpack.c.b16 %v880, %v862
    %v1061 = vpack.c.b16 %v899, %v881
    %v1062 = vpack.c.b16 %v900, %v882
    %v1063 = vpack.c.b16 %v901, %v883
    %v1064 = vpack.c.b16 %v902, %v884
    %v1065 = vpack.c.b16 %v903, %v885
    %v1066 = vpack.c.b16 %v904, %v886
    %v1067 = vpack.c.b16 %v905, %v887
    %v1068 = vpack.c.b16 %v906, %v888
    %v1069 = vpack.c.b16 %v907, %v889
    %v1070 = vpack.c.b16 %v908, %v890
    %v1071 = vpack.c.b16 %v909, %v891
    %v1072 = vpack.c.b16 %v910, %v892
    %v1073 = vpack.c.b16 %v911, %v893
    %v1074 = vpack.c.b16 %v912, %v894
    %v1075 = vpack.c.b16 %v913, %v895
    %v1076 = vpack.c.b16 %v914, %v896
    %v1077 = vpack.c.b16 %v915, %v897
    %v1078 = vpack.c.b16 %v916, %v898
    %v1079 = vpack.c.b16 %v935, %v917
    %v1080 = vpack.c.b16 %v936, %v918
    %v1081 = vpack.c.b16 %v937, %v919
    %v1082 = vpack.c.b16 %v938, %v920
    %v1083 = vpack.c.b16 %v939, %v921
    %v1084 = vpack.c.b16 %v940, %v922
    %v1085 = vpack.c.b16 %v941, %v923
    %v1086 = vpack.c.b16 %v942, %v924
    %v1087 = vpack.c.b16 %v943, %v925
    %v1088 = vpack.c.b16 %v944, %v926
    %v1089 = vpack.c.b16 %v945, %v927
    %v1090 = vpack.c.b16 %v946, %v928
    %v1091 = vpack.c.b16 %v947, %v929
    %v1092 = vpack.c.b16 %v948, %v930
    %v1093 = vpack.c.b16 %v949, %v931
    %v1094 = vpack.c.b16 %v950, %v932
    %v1095 = vpack.c.b16 %v951, %v933
    %v1096 = vpack.c.b16 %v952, %v934
    %1241 = vmatpush.bf16.msra.mxu0 %v1079
    %1242 = vmatpush.bf16.msra.mxu0 %v1061
    %1243 = vmatpush.bf16.msra.mxu0 %v1043
    %1244 = vmatpush.bf16.msra.mxu0 %v1025
    %1245 = vmatpush.bf16.msra.mxu0 %v1007
    %1246 = vmatpush.bf16.msra.mxu0 %v989
    %1247 = vmatpush.bf16.msra.mxu0 %v971
    %1248 = vmatpush.bf16.msra.mxu0 %v953
    %1249 = vmatmul.bf16.gmra.mxu0 %v376
    %v1250 = vpop.f32.mrf.mxu0
    %v1251 = vadd.f32 0.0, %v1250
    %v1252 = vpop.f32.mrf.mxu0
    %1253 = vdwg.mxu0
    %1254 = vmatpush.bf16.msra.mxu0 %v1080
    %1255 = vmatpush.bf16.msra.mxu0 %v1062
    %1256 = vmatpush.bf16.msra.mxu0 %v1044
    %1257 = vmatpush.bf16.msra.mxu0 %v1026
    %1258 = vmatpush.bf16.msra.mxu0 %v1008
    %1259 = vmatpush.bf16.msra.mxu0 %v990
    %1260 = vmatpush.bf16.msra.mxu0 %v972
    %1261 = vmatpush.bf16.msra.mxu0 %v954
    %1262 = vmatmul.bf16.gmra.mxu0 %v376
    %v1263 = vpop.f32.mrf.mxu0
    %v1264 = vadd.f32 0.0, %v1263
    %v1265 = vpop.f32.mrf.mxu0
    %1266 = vdwg.mxu0
    %1267 = vmatpush.bf16.msra.mxu0 %v1081
    %1268 = vmatpush.bf16.msra.mxu0 %v1063
    %1269 = vmatpush.bf16.msra.mxu0 %v1045
    %1270 = vmatpush.bf16.msra.mxu0 %v1027
    %1271 = vmatpush.bf16.msra.mxu0 %v1009
    %1272 = vmatpush.bf16.msra.mxu0 %v991
    %1273 = vmatpush.bf16.msra.mxu0 %v973
    %1274 = vmatpush.bf16.msra.mxu0 %v955
    %1275 = vmatmul.bf16.gmra.mxu0 %v376
    %v1276 = vpop.f32.mrf.mxu0
    %v1277 = vadd.f32 0.0, %v1276
    %v1278 = vpop.f32.mrf.mxu0
    %1279 = vdwg.mxu0
    %1280 = vmatpush.bf16.msra.mxu0 %v1082
    %1281 = vmatpush.bf16.msra.mxu0 %v1064
    %1282 = vmatpush.bf16.msra.mxu0 %v1046
    %1283 = vmatpush.bf16.msra.mxu0 %v1028
    %1284 = vmatpush.bf16.msra.mxu0 %v1010
    %1285 = vmatpush.bf16.msra.mxu0 %v992
    %1286 = vmatpush.bf16.msra.mxu0 %v974
    %1287 = vmatpush.bf16.msra.mxu0 %v956
    %1288 = vmatmul.bf16.gmra.mxu0 %v376
    %v1289 = vpop.f32.mrf.mxu0
    %v1290 = vadd.f32 0.0, %v1289
    %v1291 = vpop.f32.mrf.mxu0
    %1292 = vdwg.mxu0
    %1293 = vmatpush.bf16.msra.mxu0 %v1083
    %1294 = vmatpush.bf16.msra.mxu0 %v1065
    %1295 = vmatpush.bf16.msra.mxu0 %v1047
    %1296 = vmatpush.bf16.msra.mxu0 %v1029
    %1297 = vmatpush.bf16.msra.mxu0 %v1011
    %1298 = vmatpush.bf16.msra.mxu0 %v993
    %1299 = vmatpush.bf16.msra.mxu0 %v975
    %1300 = vmatpush.bf16.msra.mxu0 %v957
    %1301 = vmatmul.bf16.gmra.mxu0 %v376
    %v1302 = vpop.f32.mrf.mxu0
    %v1303 = vadd.f32 0.0, %v1302
    %v1304 = vpop.f32.mrf.mxu0
    %1305 = vdwg.mxu0
    %1306 = vmatpush.bf16.msra.mxu0 %v1084
    %1307 = vmatpush.bf16.msra.mxu0 %v1066
    %1308 = vmatpush.bf16.msra.mxu0 %v1048
    %1309 = vmatpush.bf16.msra.mxu0 %v1030
    %1310 = vmatpush.bf16.msra.mxu0 %v1012
    %1311 = vmatpush.bf16.msra.mxu0 %v994
    %1312 = vmatpush.bf16.msra.mxu0 %v976
    %1313 = vmatpush.bf16.msra.mxu0 %v958
    %1314 = vmatmul.bf16.gmra.mxu0 %v376
    %v1315 = vpop.f32.mrf.mxu0
    %v1316 = vadd.f32 0.0, %v1315
    %v1317 = vpop.f32.mrf.mxu0
    %1318 = vdwg.mxu0
    %1319 = vmatpush.bf16.msra.mxu0 %v1085
    %1320 = vmatpush.bf16.msra.mxu0 %v1067
    %1321 = vmatpush.bf16.msra.mxu0 %v1049
    %1322 = vmatpush.bf16.msra.mxu0 %v1031
    %1323 = vmatpush.bf16.msra.mxu0 %v1013
    %1324 = vmatpush.bf16.msra.mxu0 %v995
    %1325 = vmatpush.bf16.msra.mxu0 %v977
    %1326 = vmatpush.bf16.msra.mxu0 %v959
    %1327 = vmatmul.bf16.gmra.mxu0 %v376
    %v1328 = vpop.f32.mrf.mxu0
    %v1329 = vadd.f32 0.0, %v1328
    %v1330 = vpop.f32.mrf.mxu0
    %1331 = vdwg.mxu0
    %1332 = vmatpush.bf16.msra.mxu0 %v1086
    %1333 = vmatpush.bf16.msra.mxu0 %v1068
    %1334 = vmatpush.bf16.msra.mxu0 %v1050
    %1335 = vmatpush.bf16.msra.mxu0 %v1032
    %1336 = vmatpush.bf16.msra.mxu0 %v1014
    %1337 = vmatpush.bf16.msra.mxu0 %v996
    %1338 = vmatpush.bf16.msra.mxu0 %v978
    %1339 = vmatpush.bf16.msra.mxu0 %v960
    %1340 = vmatmul.bf16.gmra.mxu0 %v376
    %v1341 = vpop.f32.mrf.mxu0
    %v1342 = vadd.f32 0.0, %v1341
    %v1343 = vpop.f32.mrf.mxu0
    %1344 = vdwg.mxu0
    %1345 = vmatpush.bf16.msra.mxu0 %v1087
    %1346 = vmatpush.bf16.msra.mxu0 %v1069
    %1347 = vmatpush.bf16.msra.mxu0 %v1051
    %1348 = vmatpush.bf16.msra.mxu0 %v1033
    %1349 = vmatpush.bf16.msra.mxu0 %v1015
    %1350 = vmatpush.bf16.msra.mxu0 %v997
    %1351 = vmatpush.bf16.msra.mxu0 %v979
    %1352 = vmatpush.bf16.msra.mxu0 %v961
    %1353 = vmatmul.bf16.gmra.mxu0 %v376
    %v1354 = vpop.f32.mrf.mxu0
    %v1355 = vadd.f32 0.0, %v1354
    %v1356 = vpop.f32.mrf.mxu0
    %1357 = vdwg.mxu0
    %1358 = vmatpush.bf16.msra.mxu0 %v1088
    %1359 = vmatpush.bf16.msra.mxu0 %v1070
    %1360 = vmatpush.bf16.msra.mxu0 %v1052
    %1361 = vmatpush.bf16.msra.mxu0 %v1034
    %1362 = vmatpush.bf16.msra.mxu0 %v1016
    %1363 = vmatpush.bf16.msra.mxu0 %v998
    %1364 = vmatpush.bf16.msra.mxu0 %v980
    %1365 = vmatpush.bf16.msra.mxu0 %v962
    %1366 = vmatmul.bf16.gmra.mxu0 %v376
    %v1367 = vpop.f32.mrf.mxu0
    %v1368 = vadd.f32 0.0, %v1367
    %v1369 = vpop.f32.mrf.mxu0
    %1370 = vdwg.mxu0
    %1371 = vmatpush.bf16.msra.mxu0 %v1089
    %1372 = vmatpush.bf16.msra.mxu0 %v1071
    %1373 = vmatpush.bf16.msra.mxu0 %v1053
    %1374 = vmatpush.bf16.msra.mxu0 %v1035
    %1375 = vmatpush.bf16.msra.mxu0 %v1017
    %1376 = vmatpush.bf16.msra.mxu0 %v999
    %1377 = vmatpush.bf16.msra.mxu0 %v981
    %1378 = vmatpush.bf16.msra.mxu0 %v963
    %1379 = vmatmul.bf16.gmra.mxu0 %v376
    %v1380 = vpop.f32.mrf.mxu0
    %v1381 = vadd.f32 0.0, %v1380
    %v1382 = vpop.f32.mrf.mxu0
    %1383 = vdwg.mxu0
    %1384 = vmatpush.bf16.msra.mxu0 %v1090
    %1385 = vmatpush.bf16.msra.mxu0 %v1072
    %1386 = vmatpush.bf16.msra.mxu0 %v1054
    %1387 = vmatpush.bf16.msra.mxu0 %v1036
    %1388 = vmatpush.bf16.msra.mxu0 %v1018
    %1389 = vmatpush.bf16.msra.mxu0 %v1000
    %1390 = vmatpush.bf16.msra.mxu0 %v982
    %1391 = vmatpush.bf16.msra.mxu0 %v964
    %1392 = vmatmul.bf16.gmra.mxu0 %v376
    %v1393 = vpop.f32.mrf.mxu0
    %v1394 = vadd.f32 0.0, %v1393
    %v1395 = vpop.f32.mrf.mxu0
    %1396 = vdwg.mxu0
    %1397 = vmatpush.bf16.msra.mxu0 %v1091
    %1398 = vmatpush.bf16.msra.mxu0 %v1073
    %1399 = vmatpush.bf16.msra.mxu0 %v1055
    %1400 = vmatpush.bf16.msra.mxu0 %v1037
    %1401 = vmatpush.bf16.msra.mxu0 %v1019
    %1402 = vmatpush.bf16.msra.mxu0 %v1001
    %1403 = vmatpush.bf16.msra.mxu0 %v983
    %1404 = vmatpush.bf16.msra.mxu0 %v965
    %1405 = vmatmul.bf16.gmra.mxu0 %v376
    %v1406 = vpop.f32.mrf.mxu0
    %v1407 = vadd.f32 0.0, %v1406
    %v1408 = vpop.f32.mrf.mxu0
    %1409 = vdwg.mxu0
    %1410 = vmatpush.bf16.msra.mxu0 %v1092
    %1411 = vmatpush.bf16.msra.mxu0 %v1074
    %1412 = vmatpush.bf16.msra.mxu0 %v1056
    %1413 = vmatpush.bf16.msra.mxu0 %v1038
    %1414 = vmatpush.bf16.msra.mxu0 %v1020
    %1415 = vmatpush.bf16.msra.mxu0 %v1002
    %1416 = vmatpush.bf16.msra.mxu0 %v984
    %1417 = vmatpush.bf16.msra.mxu0 %v966
    %1418 = vmatmul.bf16.gmra.mxu0 %v376
    %v1419 = vpop.f32.mrf.mxu0
    %v1420 = vadd.f32 0.0, %v1419
    %v1421 = vpop.f32.mrf.mxu0
    %1422 = vdwg.mxu0
    %1423 = vmatpush.bf16.msra.mxu0 %v1093
    %1424 = vmatpush.bf16.msra.mxu0 %v1075
    %1425 = vmatpush.bf16.msra.mxu0 %v1057
    %1426 = vmatpush.bf16.msra.mxu0 %v1039
    %1427 = vmatpush.bf16.msra.mxu0 %v1021
    %1428 = vmatpush.bf16.msra.mxu0 %v1003
    %1429 = vmatpush.bf16.msra.mxu0 %v985
    %1430 = vmatpush.bf16.msra.mxu0 %v967
    %1431 = vmatmul.bf16.gmra.mxu0 %v376
    %v1432 = vpop.f32.mrf.mxu0
    %v1433 = vadd.f32 0.0, %v1432
    %v1434 = vpop.f32.mrf.mxu0
    %1435 = vdwg.mxu0
    %1436 = vmatpush.bf16.msra.mxu0 %v1094
    %1437 = vmatpush.bf16.msra.mxu0 %v1076
    %1438 = vmatpush.bf16.msra.mxu0 %v1058
    %1439 = vmatpush.bf16.msra.mxu0 %v1040
    %1440 = vmatpush.bf16.msra.mxu0 %v1022
    %1441 = vmatpush.bf16.msra.mxu0 %v1004
    %1442 = vmatpush.bf16.msra.mxu0 %v986
    %1443 = vmatpush.bf16.msra.mxu0 %v968
    %1444 = vmatmul.bf16.gmra.mxu0 %v376
    %v1445 = vpop.f32.mrf.mxu0
    %v1446 = vadd.f32 0.0, %v1445
    %v1447 = vpop.f32.mrf.mxu0
    %1448 = vdwg.mxu0
    %1449 = vmatpush.bf16.msra.mxu0 %v1095
    %1450 = vmatpush.bf16.msra.mxu0 %v1077
    %1451 = vmatpush.bf16.msra.mxu0 %v1059
    %1452 = vmatpush.bf16.msra.mxu0 %v1041
    %1453 = vmatpush.bf16.msra.mxu0 %v1023
    %1454 = vmatpush.bf16.msra.mxu0 %v1005
    %1455 = vmatpush.bf16.msra.mxu0 %v987
    %1456 = vmatpush.bf16.msra.mxu0 %v969
    %1457 = vmatmul.bf16.gmra.mxu0 %v376
    %v1458 = vpop.f32.mrf.mxu0
    %v1459 = vadd.f32 0.0, %v1458
    %v1460 = vpop.f32.mrf.mxu0
    %1461 = vdwg.mxu0
    %1462 = vmatpush.bf16.msra.mxu0 %v1096
    %1463 = vmatpush.bf16.msra.mxu0 %v1078
    %1464 = vmatpush.bf16.msra.mxu0 %v1060
    %1465 = vmatpush.bf16.msra.mxu0 %v1042
    %1466 = vmatpush.bf16.msra.mxu0 %v1024
    %1467 = vmatpush.bf16.msra.mxu0 %v1006
    %1468 = vmatpush.bf16.msra.mxu0 %v988
    %1469 = vmatpush.bf16.msra.mxu0 %v970
    %1470 = vmatmul.bf16.gmra.mxu0 %v376
    %v1471 = vpop.f32.mrf.mxu0
    %v1472 = vadd.f32 0.0, %v1471
    %v1473 = vpop.f32.mrf.mxu0
    %1474 = vdwg.mxu0
    %v1475 = vld [vmem:[%s2] sm:$0xf]
    %v1476 = vld [vmem:[%s2 + $0x8] sm:$0xf]
    %v1478 = vsel %vm205, %v1476, 0
    %1480 = vmatpush.msra.mxu0 0.0
    %1481 = vmatpush.msra.mxu0 0.0
    %1482 = vmatpush.msra.mxu0 0.0
    %1483 = vmatpush.msra.mxu0 0.0
    %1484 = vmatpush.msra.mxu0 0.0
    %1485 = vmatpush.msra.mxu0 0.0
    %1486 = vmatpush.msra.mxu0 0.0
    %1487 = vmatpush.msra.mxu0 0.0
    %1488 = vmatpush.msra.mxu0 0.0
    %1489 = vmatpush.msra.mxu0 0.0
    %1490 = vmatpush.msra.mxu0 0.0
    %1491 = vmatpush.msra.mxu0 0.0
    %1492 = vmatpush.msra.mxu0 0.0
    %1493 = vmatpush.msra.mxu0 0.0
    %1494 = vmatpush.msra.mxu0 0.0
    %1495 = vmatpush.msra.mxu0 %v1277
    %1496 = vmatmul.f32.gmra.mxu0 %v1478
    %v1497 = vpop.f32.mrf.mxu0
    %v1498 = vadd.f32 0.0, %v1497
    %1499 = vdwg.mxu0
    %1500 = vmatpush.msra.mxu0 0.0
    %1501 = vmatpush.msra.mxu0 0.0
    %1502 = vmatpush.msra.mxu0 0.0
    %1503 = vmatpush.msra.mxu0 0.0
    %1504 = vmatpush.msra.mxu0 0.0
    %1505 = vmatpush.msra.mxu0 0.0
    %1506 = vmatpush.msra.mxu0 0.0
    %1507 = vmatpush.msra.mxu0 0.0
    %1508 = vmatpush.msra.mxu0 0.0
    %1509 = vmatpush.msra.mxu0 0.0
    %1510 = vmatpush.msra.mxu0 0.0
    %1511 = vmatpush.msra.mxu0 0.0
    %1512 = vmatpush.msra.mxu0 0.0
    %1513 = vmatpush.msra.mxu0 0.0
    %1514 = vmatpush.msra.mxu0 0.0
    %1515 = vmatpush.msra.mxu0 %v1290
    %1516 = vmatmul.f32.gmra.mxu0 %v1478
    %v1517 = vpop.f32.mrf.mxu0
    %v1518 = vadd.f32 0.0, %v1517
    %1519 = vdwg.mxu0
    %v1521 = vsel %vm205, %v1475, 0
    %1523 = vmatpush.msra.mxu0 0.0
    %1524 = vmatpush.msra.mxu0 0.0
    %1525 = vmatpush.msra.mxu0 0.0
    %1526 = vmatpush.msra.mxu0 0.0
    %1527 = vmatpush.msra.mxu0 0.0
    %1528 = vmatpush.msra.mxu0 0.0
    %1529 = vmatpush.msra.mxu0 0.0
    %1530 = vmatpush.msra.mxu0 0.0
    %1531 = vmatpush.msra.mxu0 0.0
    %1532 = vmatpush.msra.mxu0 0.0
    %1533 = vmatpush.msra.mxu0 0.0
    %1534 = vmatpush.msra.mxu0 0.0
    %1535 = vmatpush.msra.mxu0 0.0
    %1536 = vmatpush.msra.mxu0 0.0
    %1537 = vmatpush.msra.mxu0 0.0
    %1538 = vmatpush.msra.mxu0 %v1251
    %1539 = vmatmul.f32.gmra.mxu0 %v1521
    %v1540 = vpop.f32.mrf.mxu0
    %v1541 = vadd.f32 %v1498, %v1540
    %1542 = vdwg.mxu0
    %1543 = vmatpush.msra.mxu0 0.0
    %1544 = vmatpush.msra.mxu0 0.0
    %1545 = vmatpush.msra.mxu0 0.0
    %1546 = vmatpush.msra.mxu0 0.0
    %1547 = vmatpush.msra.mxu0 0.0
    %1548 = vmatpush.msra.mxu0 0.0
    %1549 = vmatpush.msra.mxu0 0.0
    %1550 = vmatpush.msra.mxu0 0.0
    %1551 = vmatpush.msra.mxu0 0.0
    %1552 = vmatpush.msra.mxu0 0.0
    %1553 = vmatpush.msra.mxu0 0.0
    %1554 = vmatpush.msra.mxu0 0.0
    %1555 = vmatpush.msra.mxu0 0.0
    %1556 = vmatpush.msra.mxu0 0.0
    %1557 = vmatpush.msra.mxu0 0.0
    %1558 = vmatpush.msra.mxu0 %v1264
    %1559 = vmatmul.f32.gmra.mxu0 %v1521
    %v1560 = vpop.f32.mrf.mxu0
    %v1561 = vadd.f32 %v1518, %v1560
    %1562 = vdwg.mxu0
    %v1563 = vld [vmem:[%s2 + $0x10] sm:$0xf]
    %v1565 = vsel %vm205, %v1563, 0
    %1567 = vmatpush.msra.mxu0 0.0
    %1568 = vmatpush.msra.mxu0 0.0
    %1569 = vmatpush.msra.mxu0 0.0
    %1570 = vmatpush.msra.mxu0 0.0
    %1571 = vmatpush.msra.mxu0 0.0
    %1572 = vmatpush.msra.mxu0 0.0
    %1573 = vmatpush.msra.mxu0 0.0
    %1574 = vmatpush.msra.mxu0 0.0
    %1575 = vmatpush.msra.mxu0 0.0
    %1576 = vmatpush.msra.mxu0 0.0
    %1577 = vmatpush.msra.mxu0 0.0
    %1578 = vmatpush.msra.mxu0 0.0
    %1579 = vmatpush.msra.mxu0 0.0
    %1580 = vmatpush.msra.mxu0 0.0
    %1581 = vmatpush.msra.mxu0 0.0
    %1582 = vmatpush.msra.mxu0 %v1303
    %1583 = vmatmul.f32.gmra.mxu0 %v1565
    %v1584 = vpop.f32.mrf.mxu0
    %v1585 = vadd.f32 0.0, %v1584
    %1586 = vdwg.mxu0
    %1587 = vmatpush.msra.mxu0 0.0
    %1588 = vmatpush.msra.mxu0 0.0
    %1589 = vmatpush.msra.mxu0 0.0
    %1590 = vmatpush.msra.mxu0 0.0
    %1591 = vmatpush.msra.mxu0 0.0
    %1592 = vmatpush.msra.mxu0 0.0
    %1593 = vmatpush.msra.mxu0 0.0
    %1594 = vmatpush.msra.mxu0 0.0
    %1595 = vmatpush.msra.mxu0 0.0
    %1596 = vmatpush.msra.mxu0 0.0
    %1597 = vmatpush.msra.mxu0 0.0
    %1598 = vmatpush.msra.mxu0 0.0
    %1599 = vmatpush.msra.mxu0 0.0
    %1600 = vmatpush.msra.mxu0 0.0
    %1601 = vmatpush.msra.mxu0 0.0
    %1602 = vmatpush.msra.mxu0 %v1316
    %1603 = vmatmul.f32.gmra.mxu0 %v1565
    %v1604 = vpop.f32.mrf.mxu0
    %v1605 = vadd.f32 0.0, %v1604
    %1606 = vdwg.mxu0
    %v1607 = vadd.f32 %v1541, %v1585
    %v1608 = vadd.f32 %v1561, %v1605
    %v1609 = vld [vmem:[%s2 + $0x18] sm:$0xf]
    %v1611 = vsel %vm205, %v1609, 0
    %1613 = vmatpush.msra.mxu0 0.0
    %1614 = vmatpush.msra.mxu0 0.0
    %1615 = vmatpush.msra.mxu0 0.0
    %1616 = vmatpush.msra.mxu0 0.0
    %1617 = vmatpush.msra.mxu0 0.0
    %1618 = vmatpush.msra.mxu0 0.0
    %1619 = vmatpush.msra.mxu0 0.0
    %1620 = vmatpush.msra.mxu0 0.0
    %1621 = vmatpush.msra.mxu0 0.0
    %1622 = vmatpush.msra.mxu0 0.0
    %1623 = vmatpush.msra.mxu0 0.0
    %1624 = vmatpush.msra.mxu0 0.0
    %1625 = vmatpush.msra.mxu0 0.0
    %1626 = vmatpush.msra.mxu0 0.0
    %1627 = vmatpush.msra.mxu0 0.0
    %1628 = vmatpush.msra.mxu0 %v1329
    %1629 = vmatmul.f32.gmra.mxu0 %v1611
    %v1630 = vpop.f32.mrf.mxu0
    %v1631 = vadd.f32 0.0, %v1630
    %1632 = vdwg.mxu0
    %1633 = vmatpush.msra.mxu0 0.0
    %1634 = vmatpush.msra.mxu0 0.0
    %1635 = vmatpush.msra.mxu0 0.0
    %1636 = vmatpush.msra.mxu0 0.0
    %1637 = vmatpush.msra.mxu0 0.0
    %1638 = vmatpush.msra.mxu0 0.0
    %1639 = vmatpush.msra.mxu0 0.0
    %1640 = vmatpush.msra.mxu0 0.0
    %1641 = vmatpush.msra.mxu0 0.0
    %1642 = vmatpush.msra.mxu0 0.0
    %1643 = vmatpush.msra.mxu0 0.0
    %1644 = vmatpush.msra.mxu0 0.0
    %1645 = vmatpush.msra.mxu0 0.0
    %1646 = vmatpush.msra.mxu0 0.0
    %1647 = vmatpush.msra.mxu0 0.0
    %1648 = vmatpush.msra.mxu0 %v1342
    %1649 = vmatmul.f32.gmra.mxu0 %v1611
    %v1650 = vpop.f32.mrf.mxu0
    %v1651 = vadd.f32 0.0, %v1650
    %1652 = vdwg.mxu0
    %v1653 = vadd.f32 %v1607, %v1631
    %v1654 = vadd.f32 %v1608, %v1651
    %v1655 = vld [vmem:[%s2 + $0x20] sm:$0xf]
    %v1657 = vsel %vm205, %v1655, 0
    %1659 = vmatpush.msra.mxu0 0.0
    %1660 = vmatpush.msra.mxu0 0.0
    %1661 = vmatpush.msra.mxu0 0.0
    %1662 = vmatpush.msra.mxu0 0.0
    %1663 = vmatpush.msra.mxu0 0.0
    %1664 = vmatpush.msra.mxu0 0.0
    %1665 = vmatpush.msra.mxu0 0.0
    %1666 = vmatpush.msra.mxu0 0.0
    %1667 = vmatpush.msra.mxu0 0.0
    %1668 = vmatpush.msra.mxu0 0.0
    %1669 = vmatpush.msra.mxu0 0.0
    %1670 = vmatpush.msra.mxu0 0.0
    %1671 = vmatpush.msra.mxu0 0.0
    %1672 = vmatpush.msra.mxu0 0.0
    %1673 = vmatpush.msra.mxu0 0.0
    %1674 = vmatpush.msra.mxu0 %v1355
    %1675 = vmatmul.f32.gmra.mxu0 %v1657
    %v1676 = vpop.f32.mrf.mxu0
    %v1677 = vadd.f32 0.0, %v1676
    %1678 = vdwg.mxu0
    %1679 = vmatpush.msra.mxu0 0.0
    %1680 = vmatpush.msra.mxu0 0.0
    %1681 = vmatpush.msra.mxu0 0.0
    %1682 = vmatpush.msra.mxu0 0.0
    %1683 = vmatpush.msra.mxu0 0.0
    %1684 = vmatpush.msra.mxu0 0.0
    %1685 = vmatpush.msra.mxu0 0.0
    %1686 = vmatpush.msra.mxu0 0.0
    %1687 = vmatpush.msra.mxu0 0.0
    %1688 = vmatpush.msra.mxu0 0.0
    %1689 = vmatpush.msra.mxu0 0.0
    %1690 = vmatpush.msra.mxu0 0.0
    %1691 = vmatpush.msra.mxu0 0.0
    %1692 = vmatpush.msra.mxu0 0.0
    %1693 = vmatpush.msra.mxu0 0.0
    %1694 = vmatpush.msra.mxu0 %v1368
    %1695 = vmatmul.f32.gmra.mxu0 %v1657
    %v1696 = vpop.f32.mrf.mxu0
    %v1697 = vadd.f32 0.0, %v1696
    %1698 = vdwg.mxu0
    %v1699 = vadd.f32 %v1653, %v1677
    %v1700 = vadd.f32 %v1654, %v1697
    %v1701 = vld [vmem:[%s2 + $0x28] sm:$0xf]
    %v1703 = vsel %vm205, %v1701, 0
    %1705 = vmatpush.msra.mxu0 0.0
    %1706 = vmatpush.msra.mxu0 0.0
    %1707 = vmatpush.msra.mxu0 0.0
    %1708 = vmatpush.msra.mxu0 0.0
    %1709 = vmatpush.msra.mxu0 0.0
    %1710 = vmatpush.msra.mxu0 0.0
    %1711 = vmatpush.msra.mxu0 0.0
    %1712 = vmatpush.msra.mxu0 0.0
    %1713 = vmatpush.msra.mxu0 0.0
    %1714 = vmatpush.msra.mxu0 0.0
    %1715 = vmatpush.msra.mxu0 0.0
    %1716 = vmatpush.msra.mxu0 0.0
    %1717 = vmatpush.msra.mxu0 0.0
    %1718 = vmatpush.msra.mxu0 0.0
    %1719 = vmatpush.msra.mxu0 0.0
    %1720 = vmatpush.msra.mxu0 %v1381
    %1721 = vmatmul.f32.gmra.mxu0 %v1703
    %v1722 = vpop.f32.mrf.mxu0
    %v1723 = vadd.f32 0.0, %v1722
    %1724 = vdwg.mxu0
    %1725 = vmatpush.msra.mxu0 0.0
    %1726 = vmatpush.msra.mxu0 0.0
    %1727 = vmatpush.msra.mxu0 0.0
    %1728 = vmatpush.msra.mxu0 0.0
    %1729 = vmatpush.msra.mxu0 0.0
    %1730 = vmatpush.msra.mxu0 0.0
    %1731 = vmatpush.msra.mxu0 0.0
    %1732 = vmatpush.msra.mxu0 0.0
    %1733 = vmatpush.msra.mxu0 0.0
    %1734 = vmatpush.msra.mxu0 0.0
    %1735 = vmatpush.msra.mxu0 0.0
    %1736 = vmatpush.msra.mxu0 0.0
    %1737 = vmatpush.msra.mxu0 0.0
    %1738 = vmatpush.msra.mxu0 0.0
    %1739 = vmatpush.msra.mxu0 0.0
    %1740 = vmatpush.msra.mxu0 %v1394
    %1741 = vmatmul.f32.gmra.mxu0 %v1703
    %v1742 = vpop.f32.mrf.mxu0
    %v1743 = vadd.f32 0.0, %v1742
    %1744 = vdwg.mxu0
    %v1745 = vadd.f32 %v1699, %v1723
    %v1746 = vadd.f32 %v1700, %v1743
    %v1747 = vld [vmem:[%s2 + $0x30] sm:$0xf]
    %v1749 = vsel %vm205, %v1747, 0
    %1751 = vmatpush.msra.mxu0 0.0
    %1752 = vmatpush.msra.mxu0 0.0
    %1753 = vmatpush.msra.mxu0 0.0
    %1754 = vmatpush.msra.mxu0 0.0
    %1755 = vmatpush.msra.mxu0 0.0
    %1756 = vmatpush.msra.mxu0 0.0
    %1757 = vmatpush.msra.mxu0 0.0
    %1758 = vmatpush.msra.mxu0 0.0
    %1759 = vmatpush.msra.mxu0 0.0
    %1760 = vmatpush.msra.mxu0 0.0
    %1761 = vmatpush.msra.mxu0 0.0
    %1762 = vmatpush.msra.mxu0 0.0
    %1763 = vmatpush.msra.mxu0 0.0
    %1764 = vmatpush.msra.mxu0 0.0
    %1765 = vmatpush.msra.mxu0 0.0
    %1766 = vmatpush.msra.mxu0 %v1407
    %1767 = vmatmul.f32.gmra.mxu0 %v1749
    %v1768 = vpop.f32.mrf.mxu0
    %v1769 = vadd.f32 0.0, %v1768
    %1770 = vdwg.mxu0
    %1771 = vmatpush.msra.mxu0 0.0
    %1772 = vmatpush.msra.mxu0 0.0
    %1773 = vmatpush.msra.mxu0 0.0
    %1774 = vmatpush.msra.mxu0 0.0
    %1775 = vmatpush.msra.mxu0 0.0
    %1776 = vmatpush.msra.mxu0 0.0
    %1777 = vmatpush.msra.mxu0 0.0
    %1778 = vmatpush.msra.mxu0 0.0
    %1779 = vmatpush.msra.mxu0 0.0
    %1780 = vmatpush.msra.mxu0 0.0
    %1781 = vmatpush.msra.mxu0 0.0
    %1782 = vmatpush.msra.mxu0 0.0
    %1783 = vmatpush.msra.mxu0 0.0
    %1784 = vmatpush.msra.mxu0 0.0
    %1785 = vmatpush.msra.mxu0 0.0
    %1786 = vmatpush.msra.mxu0 %v1420
    %1787 = vmatmul.f32.gmra.mxu0 %v1749
    %v1788 = vpop.f32.mrf.mxu0
    %v1789 = vadd.f32 0.0, %v1788
    %1790 = vdwg.mxu0
    %v1791 = vadd.f32 %v1745, %v1769
    %v1792 = vadd.f32 %v1746, %v1789
    %v1793 = vld [vmem:[%s2 + $0x38] sm:$0xf]
    %v1795 = vsel %vm205, %v1793, 0
    %1797 = vmatpush.msra.mxu0 0.0
    %1798 = vmatpush.msra.mxu0 0.0
    %1799 = vmatpush.msra.mxu0 0.0
    %1800 = vmatpush.msra.mxu0 0.0
    %1801 = vmatpush.msra.mxu0 0.0
    %1802 = vmatpush.msra.mxu0 0.0
    %1803 = vmatpush.msra.mxu0 0.0
    %1804 = vmatpush.msra.mxu0 0.0
    %1805 = vmatpush.msra.mxu0 0.0
    %1806 = vmatpush.msra.mxu0 0.0
    %1807 = vmatpush.msra.mxu0 0.0
    %1808 = vmatpush.msra.mxu0 0.0
    %1809 = vmatpush.msra.mxu0 0.0
    %1810 = vmatpush.msra.mxu0 0.0
    %1811 = vmatpush.msra.mxu0 0.0
    %1812 = vmatpush.msra.mxu0 %v1433
    %1813 = vmatmul.f32.gmra.mxu0 %v1795
    %v1814 = vpop.f32.mrf.mxu0
    %v1815 = vadd.f32 0.0, %v1814
    %1816 = vdwg.mxu0
    %1817 = vmatpush.msra.mxu0 0.0
    %1818 = vmatpush.msra.mxu0 0.0
    %1819 = vmatpush.msra.mxu0 0.0
    %1820 = vmatpush.msra.mxu0 0.0
    %1821 = vmatpush.msra.mxu0 0.0
    %1822 = vmatpush.msra.mxu0 0.0
    %1823 = vmatpush.msra.mxu0 0.0
    %1824 = vmatpush.msra.mxu0 0.0
    %1825 = vmatpush.msra.mxu0 0.0
    %1826 = vmatpush.msra.mxu0 0.0
    %1827 = vmatpush.msra.mxu0 0.0
    %1828 = vmatpush.msra.mxu0 0.0
    %1829 = vmatpush.msra.mxu0 0.0
    %1830 = vmatpush.msra.mxu0 0.0
    %1831 = vmatpush.msra.mxu0 0.0
    %1832 = vmatpush.msra.mxu0 %v1446
    %1833 = vmatmul.f32.gmra.mxu0 %v1795
    %v1834 = vpop.f32.mrf.mxu0
    %v1835 = vadd.f32 0.0, %v1834
    %1836 = vdwg.mxu0
    %v1837 = vadd.f32 %v1791, %v1815
    %v1838 = vadd.f32 %v1792, %v1835
    %v1839 = vld [vmem:[%s2 + $0x40] sm:$0xf]
    %v1841 = vsel %vm205, %v1839, 0
    %1843 = vmatpush.msra.mxu0 0.0
    %1844 = vmatpush.msra.mxu0 0.0
    %1845 = vmatpush.msra.mxu0 0.0
    %1846 = vmatpush.msra.mxu0 0.0
    %1847 = vmatpush.msra.mxu0 0.0
    %1848 = vmatpush.msra.mxu0 0.0
    %1849 = vmatpush.msra.mxu0 0.0
    %1850 = vmatpush.msra.mxu0 0.0
    %1851 = vmatpush.msra.mxu0 0.0
    %1852 = vmatpush.msra.mxu0 0.0
    %1853 = vmatpush.msra.mxu0 0.0
    %1854 = vmatpush.msra.mxu0 0.0
    %1855 = vmatpush.msra.mxu0 0.0
    %1856 = vmatpush.msra.mxu0 0.0
    %1857 = vmatpush.msra.mxu0 0.0
    %1858 = vmatpush.msra.mxu0 %v1459
    %1859 = vmatmul.f32.gmra.mxu0 %v1841
    %v1860 = vpop.f32.mrf.mxu0
    %v1861 = vadd.f32 0.0, %v1860
    %1862 = vdwg.mxu0
    %1863 = vmatpush.msra.mxu0 0.0
    %1864 = vmatpush.msra.mxu0 0.0
    %1865 = vmatpush.msra.mxu0 0.0
    %1866 = vmatpush.msra.mxu0 0.0
    %1867 = vmatpush.msra.mxu0 0.0
    %1868 = vmatpush.msra.mxu0 0.0
    %1869 = vmatpush.msra.mxu0 0.0
    %1870 = vmatpush.msra.mxu0 0.0
    %1871 = vmatpush.msra.mxu0 0.0
    %1872 = vmatpush.msra.mxu0 0.0
    %1873 = vmatpush.msra.mxu0 0.0
    %1874 = vmatpush.msra.mxu0 0.0
    %1875 = vmatpush.msra.mxu0 0.0
    %1876 = vmatpush.msra.mxu0 0.0
    %1877 = vmatpush.msra.mxu0 0.0
    %1878 = vmatpush.msra.mxu0 %v1472
    %1879 = vmatmul.f32.gmra.mxu0 %v1841
    %v1880 = vpop.f32.mrf.mxu0
    %v1881 = vadd.f32 0.0, %v1880
    %1882 = vdwg.mxu0
    %v1883 = vadd.f32 %v1837, %v1861
    %v1884 = vadd.f32 %v1838, %v1881
    %v1885 = vmul.f32 %v1883, 0.5
    %v1886 = vmul.f32 %v1884, 0.5
    %v1887 = vmul.f32 %v1883, %v1883
    %v1888 = vmul.f32 %v1884, %v1884
    %v1889 = vmul.f32 %v1887, %v1883
    %v1890 = vmul.f32 %v1888, %v1884
    %v1891 = vmul.f32 %v1889, 0.044715
    %v1892 = vmul.f32 %v1890, 0.044715
    %v1893 = vadd.f32 %v1883, %v1891
    %v1894 = vadd.f32 %v1884, %v1892
    %v1895 = vmul.f32 %v1893, 0.7978846
    %v1896 = vmul.f32 %v1894, 0.7978846
    %v1897 = vtanh.pop %v1895
    %v1898 = vtanh.pop %v1896
    %v1899 = vadd.f32 %v1897, 1.0
    %v1900 = vadd.f32 %v1898, 1.0
    %v1901 = vmul.f32 %v1885, %v1899
    %v1902 = vmul.f32 %v1886, %v1900
    %v1905 = vrot.slane %v1902, 4
    %v1906 = vsel %vm337, %v1901, %v1905
    %1908 = vst [vmem:[%s7] sm:$0xff] %v1906
    // Predicated region
    $region38: #{model_forward.1} parent=1 // pred_check
      _
    $region39: #{model_forward.1} parent=1 // pred_check_branch
      %1910 = sbr.rel (0) target = $region41
    $region40: #{model_forward.1} parent=1 // pred_region
      _
    $region41: #{model_forward.1} parent=1 // pred_fallthru
      _
    // Predicated region
    $region42: #{model_forward.1} parent=1 // pred_check
      _
    $region43: #{model_forward.1} parent=1 // pred_check_branch
      %1912 = sbr.rel (0) target = $region45
    $region44: #{model_forward.1} parent=1 // pred_region
      _
    $region45: #{model_forward.1} parent=1 // pred_fallthru
      _
    %1913 = vsyncpa [#allocation3], 1
    %1914 = vsyncpa [#allocation5], 1

</llo_original>
